<compile_context>
chip_gen: v5e
topology: v5e:2x2
jax: 0.10.0
libtpu: 0.0.40
codegen_flags: <defaults>
</compile_context>

<pallas_src>
import functools

import jax
import jax.numpy as jnp
from jax import lax
from jax.experimental import pallas as pl
from jax.experimental.pallas import tpu as pltpu


def _self_attention_kernel(x_ref, wqkv_ref, bqkv_ref, gamma_ref, o_ref, *,
                           bb, n_chan, compute_dtype):
    gamma = gamma_ref[0]                          # SMEM scalar
    w = wqkv_ref[...]                             # (3C, C), already compute_dtype
    bias = bqkv_ref[...]                          # (3C, 1), f32
    contract_last = (((1,), (1,)), ((), ()))      # a @ b^T

    # Static per-batch loop; every matmul is a plain 2-D MXU matmul and each
    # iteration stores its (C, N) result directly into o_ref[b], so nothing
    # stays live across iterations and no lane-axis slicing is needed.
    for b in range(bb):
        xb = x_ref[b]                             # (C, N) f32, leading-axis index

        # Fused QKV projection: one MXU matmul, f32 accumulation + f32 bias.
        qkv = jnp.dot(w, xb.astype(compute_dtype),
                      preferred_element_type=jnp.float32) + bias       # (3C, N)

        # Major-axis splits at multiples of C (multiple of 8 sublanes): cheap.
        q = qkv[0:n_chan].astype(compute_dtype)
        k = qkv[n_chan:2 * n_chan].astype(compute_dtype)
        v = qkv[2 * n_chan:3 * n_chan].astype(compute_dtype)

        # attention = q @ k^T (contract last axes), f32 accumulation.
        attn = lax.dot_general(q, k, contract_last,
                               preferred_element_type=jnp.float32)     # (C, C)

        # Softmax in f32; reciprocal on the EUP (free slot), multiply on VPU.
        m = jnp.max(attn, axis=-1, keepdims=True)
        e = jnp.exp(attn - m)
        p = e * pl.reciprocal(jnp.sum(e, axis=-1, keepdims=True), approx=True)

        # out = v @ attention^T (requires N == C), f32 accumulation.
        out = lax.dot_general(v, p.astype(compute_dtype), contract_last,
                              preferred_element_type=jnp.float32)      # (C, N)

        # Residual in f32 against the un-rounded x; store straight to the block.
        o_ref[b] = (gamma * out + xb).astype(o_ref.dtype)


def _grid_parallel_steps():
    """Target grid-step count: one fat step per schedulable TensorCore."""
    try:
        kind = jax.devices()[0].device_kind.lower()
    except Exception:
        return 1
    if any(t in kind for t in ("v5e", "v5 lite", "v5lite", "v6e", "v6 lite", "v6lite")):
        return 1                                   # single TensorCore per chip
    if any(t in kind for t in ("7x", "v7", "v4", "v5p")):
        return 2                                   # dual-TC / megacore parts
    return 1


def _choose_batch_block(batch, n_tok, n_steps, fold_target=2048, max_unroll=32):
    """Batch elements folded into one grid step.

    Big enough that per-step work dwarfs the ~600-cycle step overhead
    (BB*N up to ~2048), small enough to bound the static unroll, and chosen so
    the grid has ~n_steps steps for megacore / dual-TC sharding.
    """
    cap = max(1, min(max_unroll, fold_target // max(n_tok, 1)))
    bb = max(1, min(batch // max(n_steps, 1), cap))
    while batch % bb:
        bb -= 1
    return bb


def self_attention(x_nchw, wq, bq, wk, bk, wv, bv, gamma, *,
                   compute_dtype=jnp.bfloat16):
    """x_nchw: (B, C, H, W). Weights: (C, C); biases: (C,); gamma: (1,)."""
    B, C, H, W = x_nchw.shape
    N = H * W
    assert N == C, "SelfAttention (as written in PyTorch) requires H*W == C."

    # x stays f32 in HBM (residual uses un-rounded x); reshape only, no transpose.
    x3 = x_nchw.astype(jnp.float32).reshape(B, C, N)

    # Fuse the three 1x1-conv projections: one (3C, C) weight in the matmul
    # operand dtype, one (3C, 1) f32 bias.
    w_qkv = jnp.concatenate([wq, wk, wv], axis=0).astype(compute_dtype)
    b_qkv = jnp.concatenate([bq, bk, bv], axis=0).reshape(3 * C, 1).astype(jnp.float32)
    gamma1 = gamma.reshape(1).astype(jnp.float32)

    n_steps = _grid_parallel_steps()
    BB = _choose_batch_block(B, N, n_steps)
    NB = B // BB

    # VMEM guard (v7x scoped default is 32 MiB of its 64 MiB physical):
    # x/out blocks double-buffered + resident weights + rough per-batch
    # in-flight f32 intermediates.
    wbytes = 3 * C * C * jnp.dtype(compute_dtype).itemsize
    vmem_est = (2 * 2 * BB * C * N * 4) + 2 * (wbytes + 3 * C * 4) \
        + 10 * C * max(C, N) * 4
    extra_params = {}
    if vmem_est > 12 * 1024 * 1024:
        extra_params["vmem_limit_bytes"] = int(min(2 * vmem_est, 40 * 1024 * 1024))
    assert vmem_est < 40 * 1024 * 1024, (
        f"chosen BB={BB} needs ~{vmem_est / 2**20:.1f} MiB VMEM; shrink the fold")

    kernel = functools.partial(_self_attention_kernel, bb=BB, n_chan=C,
                               compute_dtype=compute_dtype)

    out3 = pl.pallas_call(
        kernel,
        out_shape=jax.ShapeDtypeStruct((B, C, N), jnp.float32),
        grid_spec=pltpu.PrefetchScalarGridSpec(
            num_scalar_prefetch=0,
            grid=(NB,),
            in_specs=[
                pl.BlockSpec((BB, C, N), lambda i: (i, 0, 0)),       # x batch block
                pl.BlockSpec((3 * C, C), lambda i: (0, 0)),          # fused QKV weight
                pl.BlockSpec((3 * C, 1), lambda i: (0, 0)),          # fused QKV bias
                pl.BlockSpec(memory_space=pltpu.MemorySpace.SMEM),   # gamma scalar
            ],
            out_specs=pl.BlockSpec((BB, C, N), lambda i: (i, 0, 0)),
        ),
        compiler_params=pltpu.CompilerParams(
            dimension_semantics=("parallel",), **extra_params),
    )(x3, w_qkv, b_qkv, gamma1)

    return out3.reshape(B, C, H, W)


def self_attention_ref(x_nchw, wq, bq, wk, bk, wv, bv, gamma):
    """Pure-JAX reference mirroring the PyTorch forward exactly (f32)."""
    B, C, H, W = x_nchw.shape
    N = H * W
    x = x_nchw.reshape(B, C, N)
    q = jnp.einsum('oc,bcn->bon', wq, x) + bq[None, :, None]
    k = jnp.einsum('oc,bcn->bon', wk, x) + bk[None, :, None]
    v = jnp.einsum('oc,bcn->bon', wv, x) + bv[None, :, None]
    attn = jnp.einsum('bcn,bdn->bcd', q, k)            # query @ key^T
    attn = jax.nn.softmax(attn, axis=-1)
    out = jnp.einsum('bcn,bdn->bcd', v, attn)          # value @ attention^T (N==C)
    out = out.reshape(B, C, H, W)
    return gamma.reshape(()) * out + x_nchw


if __name__ == "__main__":
    # H*W must equal C; B=4 gives one fat grid step on v5e/v6e and two parallel
    # steps on dual-TensorCore parts.
    B, C, H, W = 4, 64, 8, 8

    key = jax.random.PRNGKey(0)
    kx, kwq, kbq, kwk, kbk, kwv, kbv = jax.random.split(key, 7)

    x = jax.random.normal(kx, (B, C, H, W), dtype=jnp.float32)

    # PyTorch Conv2d(1x1) default init: uniform(-1/sqrt(fan_in), 1/sqrt(fan_in)).
    bound = 1.0 / jnp.sqrt(jnp.float32(C))
    wq = jax.random.uniform(kwq, (C, C), jnp.float32, -bound, bound)
    bq = jax.random.uniform(kbq, (C,),   jnp.float32, -bound, bound)
    wk = jax.random.uniform(kwk, (C, C), jnp.float32, -bound, bound)
    bk = jax.random.uniform(kbk, (C,),   jnp.float32, -bound, bound)
    wv = jax.random.uniform(kwv, (C, C), jnp.float32, -bound, bound)
    bv = jax.random.uniform(kbv, (C,),   jnp.float32, -bound, bound)
    # Module inits gamma to zero; use a nonzero value so the attention path is exercised.
    gamma = jnp.array([0.5], dtype=jnp.float32)

    ref = self_attention_ref(x, wq, bq, wk, bk, wv, bv, gamma)

    sa = jax.jit(self_attention, static_argnames=("compute_dtype",))

    # f32 operands: tight check (tolerance covers the EUP approx reciprocal).
    out_f32 = jax.block_until_ready(
        sa(x, wq, bq, wk, bk, wv, bv, gamma, compute_dtype=jnp.float32))
    assert out_f32.shape == (B, C, H, W)
    assert jnp.allclose(out_f32, ref, atol=5e-3, rtol=5e-3), "f32 mismatch vs reference"

    # Default path: bf16 matmul operands (MXU-peak dtype on every generation),
    # f32 accumulation / softmax / residual.
    out_bf16 = jax.block_until_ready(sa(x, wq, bq, wk, bk, wv, bv, gamma))
    assert jnp.allclose(out_bf16, ref, atol=1e-1, rtol=5e-2), "bf16 mismatch vs reference"

    print("KERNEL_OK")
</pallas_src>

<mosaic_0001>
module attributes {stable_mosaic.version = 11 : i64} {
  func.func @_self_attention_kernel(%arg0: i32, %arg1: memref<4x64x64xf32, #tpu.memory_space<vmem>>, %arg2: memref<192x64xf32, #tpu.memory_space<vmem>>, %arg3: memref<192x1xf32, #tpu.memory_space<vmem>>, %arg4: memref<1xf32, #tpu.memory_space<smem>>, %arg5: memref<4x64x64xf32, #tpu.memory_space<vmem>>) attributes {dimension_semantics = [#tpu.dimension_semantics<parallel>], iteration_bounds = array<i64: 1>, scalar_prefetch = 0 : i64, scratch_operands = 0 : i64, tpu.core_type = #tpu.core_type<tc>, window_params = [{transform_indices = @transform_0, window_bounds = array<i64: 4, 64, 64>}, {pipeline_mode = #tpu.pipeline_mode<synchronous>, transform_indices = @transform_1, window_bounds = array<i64: 192, 64>}, {pipeline_mode = #tpu.pipeline_mode<synchronous>, transform_indices = @transform_2, window_bounds = array<i64: 192, 1>}, {transform_indices = @transform_3, window_bounds = array<i64: 1>}, {transform_indices = @transform_4, window_bounds = array<i64: 4, 64, 64>}]} {
    %c0 = arith.constant 0 : index
    %0 = memref.load %arg4[%c0] : memref<1xf32, #tpu.memory_space<smem>>
    %c0_0 = arith.constant 0 : index
    %c0_1 = arith.constant 0 : index
    %1 = vector.load %arg2[%c0_0, %c0_1] : memref<192x64xf32, #tpu.memory_space<vmem>>, vector<192x64xf32>
    %c0_2 = arith.constant 0 : index
    %c0_3 = arith.constant 0 : index
    %2 = vector.load %arg3[%c0_2, %c0_3] : memref<192x1xf32, #tpu.memory_space<vmem>>, vector<192x1xf32>
    %c0_4 = arith.constant 0 : index
    %c0_5 = arith.constant 0 : index
    %c0_6 = arith.constant 0 : index
    %3 = vector.load %arg1[%c0_4, %c0_5, %c0_6] : memref<4x64x64xf32, #tpu.memory_space<vmem>>, vector<1x64x64xf32>
    %4 = vector.shape_cast %3 : vector<1x64x64xf32> to vector<64x64xf32>
    %cst = arith.constant dense<0.000000e+00> : vector<192x64xf32>
    %5 = tpu.matmul %1, %4, %cst {dimension_numbers = #tpu.dot_dimension_numbers<[1], [0], [0], [1], [0, 0, 1, 1], [], []>} : vector<192x64xf32>, vector<64x64xf32>, vector<192x64xf32> -> vector<192x64xf32>
    %6 = vector.broadcast %2 : vector<192x1xf32> to vector<192x64xf32>
    %7 = arith.addf %5, %6 : vector<192x64xf32>
    %8 = vector.extract_strided_slice %7 {offsets = [0, 0], sizes = [64, 64], strides = [1, 1]} : vector<192x64xf32> to vector<64x64xf32>
    %9 = vector.extract_strided_slice %7 {offsets = [64, 0], sizes = [64, 64], strides = [1, 1]} : vector<192x64xf32> to vector<64x64xf32>
    %10 = vector.extract_strided_slice %7 {offsets = [128, 0], sizes = [64, 64], strides = [1, 1]} : vector<192x64xf32> to vector<64x64xf32>
    %cst_7 = arith.constant dense<0.000000e+00> : vector<64x64xf32>
    %11 = tpu.matmul %8, %9, %cst_7 {dimension_numbers = #tpu.dot_dimension_numbers<[1], [1], [0], [0], [0, 0, 1, 0], [], []>} : vector<64x64xf32>, vector<64x64xf32>, vector<64x64xf32> -> vector<64x64xf32>
    %cst_8 = arith.constant dense<0xFF800000> : vector<64xf32>
    %12 = vector.multi_reduction <maximumf>, %11, %cst_8 [1] : vector<64x64xf32> to vector<64xf32>
    %13 = vector.shape_cast %12 : vector<64xf32> to vector<64x1xf32>
    %14 = vector.broadcast %13 : vector<64x1xf32> to vector<64x64xf32>
    %15 = arith.subf %11, %14 : vector<64x64xf32>
    %16 = math.exp %15 : vector<64x64xf32>
    %cst_9 = arith.constant dense<0.000000e+00> : vector<64xf32>
    %17 = vector.multi_reduction <add>, %16, %cst_9 [1] : vector<64x64xf32> to vector<64xf32>
    %18 = vector.shape_cast %17 : vector<64xf32> to vector<64x1xf32>
    %19 = tpu.reciprocal %18 {approx = true} : vector<64x1xf32> -> vector<64x1xf32>
    %20 = vector.broadcast %19 : vector<64x1xf32> to vector<64x64xf32>
    %21 = arith.mulf %16, %20 : vector<64x64xf32>
    %cst_10 = arith.constant dense<0.000000e+00> : vector<64x64xf32>
    %22 = tpu.matmul %10, %21, %cst_10 {dimension_numbers = #tpu.dot_dimension_numbers<[1], [1], [0], [0], [0, 0, 1, 0], [], []>} : vector<64x64xf32>, vector<64x64xf32>, vector<64x64xf32> -> vector<64x64xf32>
    %23 = vector.broadcast %0 : f32 to vector<64x64xf32>
    %24 = arith.mulf %23, %22 : vector<64x64xf32>
    %25 = arith.addf %24, %4 : vector<64x64xf32>
    %c0_11 = arith.constant 0 : index
    %c0_12 = arith.constant 0 : index
    %c0_13 = arith.constant 0 : index
    %26 = vector.load %arg5[%c0_11, %c0_12, %c0_13] : memref<4x64x64xf32, #tpu.memory_space<vmem>>, vector<1x64x64xf32>
    %27 = vector.shape_cast %26 : vector<1x64x64xf32> to vector<64x64xf32>
    %28 = vector.shape_cast %25 : vector<64x64xf32> to vector<1x64x64xf32>
    tpu.vector_store %arg5[%c0_11, %c0_12, %c0_13], %28 {strides = array<i32>} : memref<4x64x64xf32, #tpu.memory_space<vmem>>, vector<1x64x64xf32>,
    %c1 = arith.constant 1 : index
    %c0_14 = arith.constant 0 : index
    %c0_15 = arith.constant 0 : index
    %29 = vector.load %arg1[%c1, %c0_14, %c0_15] : memref<4x64x64xf32, #tpu.memory_space<vmem>>, vector<1x64x64xf32>
    %30 = vector.shape_cast %29 : vector<1x64x64xf32> to vector<64x64xf32>
    %cst_16 = arith.constant dense<0.000000e+00> : vector<192x64xf32>
    %31 = tpu.matmul %1, %30, %cst_16 {dimension_numbers = #tpu.dot_dimension_numbers<[1], [0], [0], [1], [0, 0, 1, 1], [], []>} : vector<192x64xf32>, vector<64x64xf32>, vector<192x64xf32> -> vector<192x64xf32>
    %32 = vector.broadcast %2 : vector<192x1xf32> to vector<192x64xf32>
    %33 = arith.addf %31, %32 : vector<192x64xf32>
    %34 = vector.extract_strided_slice %33 {offsets = [0, 0], sizes = [64, 64], strides = [1, 1]} : vector<192x64xf32> to vector<64x64xf32>
    %35 = vector.extract_strided_slice %33 {offsets = [64, 0], sizes = [64, 64], strides = [1, 1]} : vector<192x64xf32> to vector<64x64xf32>
    %36 = vector.extract_strided_slice %33 {offsets = [128, 0], sizes = [64, 64], strides = [1, 1]} : vector<192x64xf32> to vector<64x64xf32>
    %cst_17 = arith.constant dense<0.000000e+00> : vector<64x64xf32>
    %37 = tpu.matmul %34, %35, %cst_17 {dimension_numbers = #tpu.dot_dimension_numbers<[1], [1], [0], [0], [0, 0, 1, 0], [], []>} : vector<64x64xf32>, vector<64x64xf32>, vector<64x64xf32> -> vector<64x64xf32>
    %cst_18 = arith.constant dense<0xFF800000> : vector<64xf32>
    %38 = vector.multi_reduction <maximumf>, %37, %cst_18 [1] : vector<64x64xf32> to vector<64xf32>
    %39 = vector.shape_cast %38 : vector<64xf32> to vector<64x1xf32>
    %40 = vector.broadcast %39 : vector<64x1xf32> to vector<64x64xf32>
    %41 = arith.subf %37, %40 : vector<64x64xf32>
    %42 = math.exp %41 : vector<64x64xf32>
    %cst_19 = arith.constant dense<0.000000e+00> : vector<64xf32>
    %43 = vector.multi_reduction <add>, %42, %cst_19 [1] : vector<64x64xf32> to vector<64xf32>
    %44 = vector.shape_cast %43 : vector<64xf32> to vector<64x1xf32>
    %45 = tpu.reciprocal %44 {approx = true} : vector<64x1xf32> -> vector<64x1xf32>
    %46 = vector.broadcast %45 : vector<64x1xf32> to vector<64x64xf32>
    %47 = arith.mulf %42, %46 : vector<64x64xf32>
    %cst_20 = arith.constant dense<0.000000e+00> : vector<64x64xf32>
    %48 = tpu.matmul %36, %47, %cst_20 {dimension_numbers = #tpu.dot_dimension_numbers<[1], [1], [0], [0], [0, 0, 1, 0], [], []>} : vector<64x64xf32>, vector<64x64xf32>, vector<64x64xf32> -> vector<64x64xf32>
    %49 = vector.broadcast %0 : f32 to vector<64x64xf32>
    %50 = arith.mulf %49, %48 : vector<64x64xf32>
    %51 = arith.addf %50, %30 : vector<64x64xf32>
    %c1_21 = arith.constant 1 : index
    %c0_22 = arith.constant 0 : index
    %c0_23 = arith.constant 0 : index
    %52 = vector.load %arg5[%c1_21, %c0_22, %c0_23] : memref<4x64x64xf32, #tpu.memory_space<vmem>>, vector<1x64x64xf32>
    %53 = vector.shape_cast %52 : vector<1x64x64xf32> to vector<64x64xf32>
    %54 = vector.shape_cast %51 : vector<64x64xf32> to vector<1x64x64xf32>
    tpu.vector_store %arg5[%c1_21, %c0_22, %c0_23], %54 {strides = array<i32>} : memref<4x64x64xf32, #tpu.memory_space<vmem>>, vector<1x64x64xf32>,
    %c2 = arith.constant 2 : index
    %c0_24 = arith.constant 0 : index
    %c0_25 = arith.constant 0 : index
    %55 = vector.load %arg1[%c2, %c0_24, %c0_25] : memref<4x64x64xf32, #tpu.memory_space<vmem>>, vector<1x64x64xf32>
    %56 = vector.shape_cast %55 : vector<1x64x64xf32> to vector<64x64xf32>
    %cst_26 = arith.constant dense<0.000000e+00> : vector<192x64xf32>
    %57 = tpu.matmul %1, %56, %cst_26 {dimension_numbers = #tpu.dot_dimension_numbers<[1], [0], [0], [1], [0, 0, 1, 1], [], []>} : vector<192x64xf32>, vector<64x64xf32>, vector<192x64xf32> -> vector<192x64xf32>
    %58 = vector.broadcast %2 : vector<192x1xf32> to vector<192x64xf32>
    %59 = arith.addf %57, %58 : vector<192x64xf32>
    %60 = vector.extract_strided_slice %59 {offsets = [0, 0], sizes = [64, 64], strides = [1, 1]} : vector<192x64xf32> to vector<64x64xf32>
    %61 = vector.extract_strided_slice %59 {offsets = [64, 0], sizes = [64, 64], strides = [1, 1]} : vector<192x64xf32> to vector<64x64xf32>
    %62 = vector.extract_strided_slice %59 {offsets = [128, 0], sizes = [64, 64], strides = [1, 1]} : vector<192x64xf32> to vector<64x64xf32>
    %cst_27 = arith.constant dense<0.000000e+00> : vector<64x64xf32>
    %63 = tpu.matmul %60, %61, %cst_27 {dimension_numbers = #tpu.dot_dimension_numbers<[1], [1], [0], [0], [0, 0, 1, 0], [], []>} : vector<64x64xf32>, vector<64x64xf32>, vector<64x64xf32> -> vector<64x64xf32>
    %cst_28 = arith.constant dense<0xFF800000> : vector<64xf32>
    %64 = vector.multi_reduction <maximumf>, %63, %cst_28 [1] : vector<64x64xf32> to vector<64xf32>
    %65 = vector.shape_cast %64 : vector<64xf32> to vector<64x1xf32>
    %66 = vector.broadcast %65 : vector<64x1xf32> to vector<64x64xf32>
    %67 = arith.subf %63, %66 : vector<64x64xf32>
    %68 = math.exp %67 : vector<64x64xf32>
    %cst_29 = arith.constant dense<0.000000e+00> : vector<64xf32>
    %69 = vector.multi_reduction <add>, %68, %cst_29 [1] : vector<64x64xf32> to vector<64xf32>
    %70 = vector.shape_cast %69 : vector<64xf32> to vector<64x1xf32>
    %71 = tpu.reciprocal %70 {approx = true} : vector<64x1xf32> -> vector<64x1xf32>
    %72 = vector.broadcast %71 : vector<64x1xf32> to vector<64x64xf32>
    %73 = arith.mulf %68, %72 : vector<64x64xf32>
    %cst_30 = arith.constant dense<0.000000e+00> : vector<64x64xf32>
    %74 = tpu.matmul %62, %73, %cst_30 {dimension_numbers = #tpu.dot_dimension_numbers<[1], [1], [0], [0], [0, 0, 1, 0], [], []>} : vector<64x64xf32>, vector<64x64xf32>, vector<64x64xf32> -> vector<64x64xf32>
    %75 = vector.broadcast %0 : f32 to vector<64x64xf32>
    %76 = arith.mulf %75, %74 : vector<64x64xf32>
    %77 = arith.addf %76, %56 : vector<64x64xf32>
    %c2_31 = arith.constant 2 : index
    %c0_32 = arith.constant 0 : index
    %c0_33 = arith.constant 0 : index
    %78 = vector.load %arg5[%c2_31, %c0_32, %c0_33] : memref<4x64x64xf32, #tpu.memory_space<vmem>>, vector<1x64x64xf32>
    %79 = vector.shape_cast %78 : vector<1x64x64xf32> to vector<64x64xf32>
    %80 = vector.shape_cast %77 : vector<64x64xf32> to vector<1x64x64xf32>
    tpu.vector_store %arg5[%c2_31, %c0_32, %c0_33], %80 {strides = array<i32>} : memref<4x64x64xf32, #tpu.memory_space<vmem>>, vector<1x64x64xf32>,
    %c3 = arith.constant 3 : index
    %c0_34 = arith.constant 0 : index
    %c0_35 = arith.constant 0 : index
    %81 = vector.load %arg1[%c3, %c0_34, %c0_35] : memref<4x64x64xf32, #tpu.memory_space<vmem>>, vector<1x64x64xf32>
    %82 = vector.shape_cast %81 : vector<1x64x64xf32> to vector<64x64xf32>
    %cst_36 = arith.constant dense<0.000000e+00> : vector<192x64xf32>
    %83 = tpu.matmul %1, %82, %cst_36 {dimension_numbers = #tpu.dot_dimension_numbers<[1], [0], [0], [1], [0, 0, 1, 1], [], []>} : vector<192x64xf32>, vector<64x64xf32>, vector<192x64xf32> -> vector<192x64xf32>
    %84 = vector.broadcast %2 : vector<192x1xf32> to vector<192x64xf32>
    %85 = arith.addf %83, %84 : vector<192x64xf32>
    %86 = vector.extract_strided_slice %85 {offsets = [0, 0], sizes = [64, 64], strides = [1, 1]} : vector<192x64xf32> to vector<64x64xf32>
    %87 = vector.extract_strided_slice %85 {offsets = [64, 0], sizes = [64, 64], strides = [1, 1]} : vector<192x64xf32> to vector<64x64xf32>
    %88 = vector.extract_strided_slice %85 {offsets = [128, 0], sizes = [64, 64], strides = [1, 1]} : vector<192x64xf32> to vector<64x64xf32>
    %cst_37 = arith.constant dense<0.000000e+00> : vector<64x64xf32>
    %89 = tpu.matmul %86, %87, %cst_37 {dimension_numbers = #tpu.dot_dimension_numbers<[1], [1], [0], [0], [0, 0, 1, 0], [], []>} : vector<64x64xf32>, vector<64x64xf32>, vector<64x64xf32> -> vector<64x64xf32>
    %cst_38 = arith.constant dense<0xFF800000> : vector<64xf32>
    %90 = vector.multi_reduction <maximumf>, %89, %cst_38 [1] : vector<64x64xf32> to vector<64xf32>
    %91 = vector.shape_cast %90 : vector<64xf32> to vector<64x1xf32>
    %92 = vector.broadcast %91 : vector<64x1xf32> to vector<64x64xf32>
    %93 = arith.subf %89, %92 : vector<64x64xf32>
    %94 = math.exp %93 : vector<64x64xf32>
    %cst_39 = arith.constant dense<0.000000e+00> : vector<64xf32>
    %95 = vector.multi_reduction <add>, %94, %cst_39 [1] : vector<64x64xf32> to vector<64xf32>
    %96 = vector.shape_cast %95 : vector<64xf32> to vector<64x1xf32>
    %97 = tpu.reciprocal %96 {approx = true} : vector<64x1xf32> -> vector<64x1xf32>
    %98 = vector.broadcast %97 : vector<64x1xf32> to vector<64x64xf32>
    %99 = arith.mulf %94, %98 : vector<64x64xf32>
    %cst_40 = arith.constant dense<0.000000e+00> : vector<64x64xf32>
    %100 = tpu.matmul %88, %99, %cst_40 {dimension_numbers = #tpu.dot_dimension_numbers<[1], [1], [0], [0], [0, 0, 1, 0], [], []>} : vector<64x64xf32>, vector<64x64xf32>, vector<64x64xf32> -> vector<64x64xf32>
    %101 = vector.broadcast %0 : f32 to vector<64x64xf32>
    %102 = arith.mulf %101, %100 : vector<64x64xf32>
    %103 = arith.addf %102, %82 : vector<64x64xf32>
    %c3_41 = arith.constant 3 : index
    %c0_42 = arith.constant 0 : index
    %c0_43 = arith.constant 0 : index
    %104 = vector.load %arg5[%c3_41, %c0_42, %c0_43] : memref<4x64x64xf32, #tpu.memory_space<vmem>>, vector<1x64x64xf32>
    %105 = vector.shape_cast %104 : vector<1x64x64xf32> to vector<64x64xf32>
    %106 = vector.shape_cast %103 : vector<64x64xf32> to vector<1x64x64xf32>
    tpu.vector_store %arg5[%c3_41, %c0_42, %c0_43], %106 {strides = array<i32>} : memref<4x64x64xf32, #tpu.memory_space<vmem>>, vector<1x64x64xf32>,
    return
  }
  func.func @transform_0(%arg0: i32) -> (i32, i32, i32) {
    %c0_i32 = arith.constant 0 : i32
    %c0_i32_0 = arith.constant 0 : i32
    %c0_i32_1 = arith.constant 0 : i32
    return %arg0, %c0_i32, %c0_i32_0 : i32, i32, i32
  }
  func.func @transform_1(%arg0: i32) -> (i32, i32) {
    %c0_i32 = arith.constant 0 : i32
    %c0_i32_0 = arith.constant 0 : i32
    %c0_i32_1 = arith.constant 0 : i32
    return %c0_i32, %c0_i32_0 : i32, i32
  }
  func.func @transform_2(%arg0: i32) -> (i32, i32) {
    %c0_i32 = arith.constant 0 : i32
    %c0_i32_0 = arith.constant 0 : i32
    %c0_i32_1 = arith.constant 0 : i32
    return %c0_i32, %c0_i32_0 : i32, i32
  }
  func.func @transform_3(%arg0: i32) -> i32 {
    %c0_i32 = arith.constant 0 : i32
    %c0_i32_0 = arith.constant 0 : i32
    return %c0_i32 : i32
  }
  func.func @transform_4(%arg0: i32) -> (i32, i32, i32) {
    %c0_i32 = arith.constant 0 : i32
    %c0_i32_0 = arith.constant 0 : i32
    %c0_i32_1 = arith.constant 0 : i32
    return %arg0, %c0_i32, %c0_i32_0 : i32, i32, i32
  }
}

</mosaic_0001>

<llo_original>
// kernel: self_attention.1
$region0: #{self_attention.1}
  #allocation0 [shape = 'u32[]', space=smem, size = 0x4, offset = 0x4, fixed_abs, tag = 'smem constant byte address 0x4 - core index']
  #allocation1 [shape = 'u32[72,128]{1,0:T(1,128)}', space=vmem, size = 0x9000, scoped, tag = 'internal scratch']
  #allocation2 [shape = 'f32[1]{0:T(128)S(6)}', space=smem, size = 0x200, scoped, tag = 'scoped memory for self_attention.1']
  %s0 = inlined_call_operand.vmem [shape: f32[4,64,64], index: 0, kind: input, shape index: {}]
  %s1 = inlined_call_operand.vmem [shape: f32[192,64], index: 1, kind: input, shape index: {}]
  %s2 = inlined_call_operand.vmem [shape: f32[192,1], index: 2, kind: input, shape index: {}]
  %s3 = inlined_call_operand.<no memory space> [shape: f32[1], index: 3, kind: input, shape index: {}]
  %s4 = inlined_call_operand.vmem [shape: f32[4,64,64], index: 4, kind: output, shape index: {}]
  %s5 = sld [smem:[#allocation0]]
  $region26: #{self_attention.1} parent=0
    _
  %s7 = ssub.s32 1, %s5
  %s8 = scalar_select 0, %s7, %s5
  %9 = sst [smem:[#allocation2]] %s3
  // Predicated region
  $region2: #{self_attention.1} parent=0 // pred_check
    _
  $region3: #{self_attention.1} parent=0 // pred_check_branch
    %11 = sbr.rel (0) target = $region5
  $region4: #{self_attention.1} parent=0 // pred_region
    _
  $region5: #{self_attention.1} parent=0 // pred_fallthru
    _
  // Predicated region
  $region6: #{self_attention.1} parent=0 // pred_check
    _
  $region7: #{self_attention.1} parent=0 // pred_check_branch
    %13 = sbr.rel (0) target = $region9
  $region8: #{self_attention.1} parent=0 // pred_region
    _
  $region9: #{self_attention.1} parent=0 // pred_fallthru
    _
  // Predicated region
  $region10: #{self_attention.1} parent=0 // pred_check
    _
  $region11: #{self_attention.1} parent=0 // pred_check_branch
    %15 = sbr.rel (0) target = $region13
  $region12: #{self_attention.1} parent=0 // pred_region
    _
  $region13: #{self_attention.1} parent=0 // pred_fallthru
    _
  // Predicated region
  $region14: #{self_attention.1} parent=0 // pred_check
    _
  $region15: #{self_attention.1} parent=0 // pred_check_branch
    %17 = sbr.rel (0) target = $region17
  $region16: #{self_attention.1} parent=0 // pred_region
    _
  $region17: #{self_attention.1} parent=0 // pred_fallthru
    _
  %s18 = sld [smem:[#allocation2]]
  %v19 = vld [vmem:[%s1] sm:$0xff]
  %v20 = vld [vmem:[%s1 + $0x8] sm:$0xff]
  %v21 = vld [vmem:[%s1 + $0x10] sm:$0xff]
  %v22 = vld [vmem:[%s1 + $0x18] sm:$0xff]
  %v23 = vld [vmem:[%s1 + $0x20] sm:$0xff]
  %v24 = vld [vmem:[%s1 + $0x28] sm:$0xff]
  %v25 = vld [vmem:[%s1 + $0x30] sm:$0xff]
  %v26 = vld [vmem:[%s1 + $0x38] sm:$0xff]
  %v27 = vld [vmem:[%s1 + $0x40] sm:$0xff]
  %v28 = vld [vmem:[%s1 + $0x48] sm:$0xff]
  %v29 = vld [vmem:[%s1 + $0x50] sm:$0xff]
  %v30 = vld [vmem:[%s1 + $0x58] sm:$0xff]
  %v31 = vld [vmem:[%s1 + $0x60] sm:$0xff]
  %v32 = vld [vmem:[%s1 + $0x68] sm:$0xff]
  %v33 = vld [vmem:[%s1 + $0x70] sm:$0xff]
  %v34 = vld [vmem:[%s1 + $0x78] sm:$0xff]
  %v35 = vld [vmem:[%s1 + $0x80] sm:$0xff]
  %v36 = vld [vmem:[%s1 + $0x88] sm:$0xff]
  %v37 = vld [vmem:[%s1 + $0x90] sm:$0xff]
  %v38 = vld [vmem:[%s1 + $0x98] sm:$0xff]
  %v39 = vld [vmem:[%s1 + $0xa0] sm:$0xff]
  %v40 = vld [vmem:[%s1 + $0xa8] sm:$0xff]
  %v41 = vld [vmem:[%s1 + $0xb0] sm:$0xff]
  %v42 = vld [vmem:[%s1 + $0xb8] sm:$0xff]
  %v43 = vld [vmem:[%s2] sm:$0xff]
  %v44 = vld [vmem:[%s2 + $0x8] sm:$0xff]
  %v45 = vld [vmem:[%s2 + $0x10] sm:$0xff]
  %v46 = vld [vmem:[%s2 + $0x18] sm:$0xff]
  %v47 = vld [vmem:[%s2 + $0x20] sm:$0xff]
  %v48 = vld [vmem:[%s2 + $0x28] sm:$0xff]
  %v49 = vld [vmem:[%s2 + $0x30] sm:$0xff]
  %v50 = vld [vmem:[%s2 + $0x38] sm:$0xff]
  %v51 = vld [vmem:[%s2 + $0x40] sm:$0xff]
  %v52 = vld [vmem:[%s2 + $0x48] sm:$0xff]
  %v53 = vld [vmem:[%s2 + $0x50] sm:$0xff]
  %v54 = vld [vmem:[%s2 + $0x58] sm:$0xff]
  %v55 = vld [vmem:[%s2 + $0x60] sm:$0xff]
  %v56 = vld [vmem:[%s2 + $0x68] sm:$0xff]
  %v57 = vld [vmem:[%s2 + $0x70] sm:$0xff]
  %v58 = vld [vmem:[%s2 + $0x78] sm:$0xff]
  %v59 = vld [vmem:[%s2 + $0x80] sm:$0xff]
  %v60 = vld [vmem:[%s2 + $0x88] sm:$0xff]
  %v61 = vld [vmem:[%s2 + $0x90] sm:$0xff]
  %v62 = vld [vmem:[%s2 + $0x98] sm:$0xff]
  %v63 = vld [vmem:[%s2 + $0xa0] sm:$0xff]
  %v64 = vld [vmem:[%s2 + $0xa8] sm:$0xff]
  %v65 = vld [vmem:[%s2 + $0xb0] sm:$0xff]
  %v66 = vld [vmem:[%s2 + $0xb8] sm:$0xff]
  %v67 = vld [vmem:[%s0] sm:$0xff]
  %v68 = vld [vmem:[%s0 + $0x8] sm:$0xff]
  %v69 = vld [vmem:[%s0 + $0x10] sm:$0xff]
  %v70 = vld [vmem:[%s0 + $0x18] sm:$0xff]
  %v71 = vld [vmem:[%s0 + $0x20] sm:$0xff]
  %v72 = vld [vmem:[%s0 + $0x28] sm:$0xff]
  %v73 = vld [vmem:[%s0 + $0x30] sm:$0xff]
  %v74 = vld [vmem:[%s0 + $0x38] sm:$0xff]
  %76 = vset.pattern.permute.xlu0 0
  %77 = vperm.xlu0 %76, %v43
  %v78 = vpop.permute.xlu0 %77
  %81 = vset.pattern.permute.xlu0 0
  %82 = vperm.xlu0 %81, %v44
  %v83 = vpop.permute.xlu0 %82
  %86 = vset.pattern.permute.xlu0 0
  %87 = vperm.xlu0 %86, %v45
  %v88 = vpop.permute.xlu0 %87
  %91 = vset.pattern.permute.xlu0 0
  %92 = vperm.xlu0 %91, %v46
  %v93 = vpop.permute.xlu0 %92
  %96 = vset.pattern.permute.xlu0 0
  %97 = vperm.xlu0 %96, %v47
  %v98 = vpop.permute.xlu0 %97
  %101 = vset.pattern.permute.xlu0 0
  %102 = vperm.xlu0 %101, %v48
  %v103 = vpop.permute.xlu0 %102
  %106 = vset.pattern.permute.xlu0 0
  %107 = vperm.xlu0 %106, %v49
  %v108 = vpop.permute.xlu0 %107
  %111 = vset.pattern.permute.xlu0 0
  %112 = vperm.xlu0 %111, %v50
  %v113 = vpop.permute.xlu0 %112
  %116 = vset.pattern.permute.xlu0 0
  %117 = vperm.xlu0 %116, %v51
  %v118 = vpop.permute.xlu0 %117
  %121 = vset.pattern.permute.xlu0 0
  %122 = vperm.xlu0 %121, %v52
  %v123 = vpop.permute.xlu0 %122
  %126 = vset.pattern.permute.xlu0 0
  %127 = vperm.xlu0 %126, %v53
  %v128 = vpop.permute.xlu0 %127
  %131 = vset.pattern.permute.xlu0 0
  %132 = vperm.xlu0 %131, %v54
  %v133 = vpop.permute.xlu0 %132
  %136 = vset.pattern.permute.xlu0 0
  %137 = vperm.xlu0 %136, %v55
  %v138 = vpop.permute.xlu0 %137
  %141 = vset.pattern.permute.xlu0 0
  %142 = vperm.xlu0 %141, %v56
  %v143 = vpop.permute.xlu0 %142
  %146 = vset.pattern.permute.xlu0 0
  %147 = vperm.xlu0 %146, %v57
  %v148 = vpop.permute.xlu0 %147
  %151 = vset.pattern.permute.xlu0 0
  %152 = vperm.xlu0 %151, %v58
  %v153 = vpop.permute.xlu0 %152
  %156 = vset.pattern.permute.xlu0 0
  %157 = vperm.xlu0 %156, %v59
  %v158 = vpop.permute.xlu0 %157
  %161 = vset.pattern.permute.xlu0 0
  %162 = vperm.xlu0 %161, %v60
  %v163 = vpop.permute.xlu0 %162
  %166 = vset.pattern.permute.xlu0 0
  %167 = vperm.xlu0 %166, %v61
  %v168 = vpop.permute.xlu0 %167
  %171 = vset.pattern.permute.xlu0 0
  %172 = vperm.xlu0 %171, %v62
  %v173 = vpop.permute.xlu0 %172
  %176 = vset.pattern.permute.xlu0 0
  %177 = vperm.xlu0 %176, %v63
  %v178 = vpop.permute.xlu0 %177
  %181 = vset.pattern.permute.xlu0 0
  %182 = vperm.xlu0 %181, %v64
  %v183 = vpop.permute.xlu0 %182
  %186 = vset.pattern.permute.xlu0 0
  %187 = vperm.xlu0 %186, %v65
  %v188 = vpop.permute.xlu0 %187
  %191 = vset.pattern.permute.xlu0 0
  %192 = vperm.xlu0 %191, %v66
  %v193 = vpop.permute.xlu0 %192
  %vm195 = vcmask 523264
  %v197 = vsel %vm195, %v19, 0
  %v200 = vsel %vm195, %v20, 0
  %v203 = vsel %vm195, %v21, 0
  %v206 = vsel %vm195, %v22, 0
  %v209 = vsel %vm195, %v23, 0
  %v212 = vsel %vm195, %v24, 0
  %v215 = vsel %vm195, %v25, 0
  %v218 = vsel %vm195, %v26, 0
  %v221 = vsel %vm195, %v27, 0
  %v224 = vsel %vm195, %v28, 0
  %v227 = vsel %vm195, %v29, 0
  %v230 = vsel %vm195, %v30, 0
  %v233 = vsel %vm195, %v31, 0
  %v236 = vsel %vm195, %v32, 0
  %v239 = vsel %vm195, %v33, 0
  %v242 = vsel %vm195, %v34, 0
  %v245 = vsel %vm195, %v35, 0
  %v248 = vsel %vm195, %v36, 0
  %v251 = vsel %vm195, %v37, 0
  %v254 = vsel %vm195, %v38, 0
  %v257 = vsel %vm195, %v39, 0
  %v260 = vsel %vm195, %v40, 0
  %v263 = vsel %vm195, %v41, 0
  %v266 = vsel %vm195, %v42, 0
  %268 = vmatpush.msra.mxu0 0.0
  %269 = vmatpush.msra.mxu0 0.0
  %270 = vmatpush.msra.mxu0 0.0
  %271 = vmatpush.msra.mxu0 0.0
  %272 = vmatpush.msra.mxu0 0.0
  %273 = vmatpush.msra.mxu0 0.0
  %274 = vmatpush.msra.mxu0 0.0
  %275 = vmatpush.msra.mxu0 0.0
  %276 = vmatpush.msra.mxu0 %v74
  %277 = vmatpush.msra.mxu0 %v73
  %278 = vmatpush.msra.mxu0 %v72
  %279 = vmatpush.msra.mxu0 %v71
  %280 = vmatpush.msra.mxu0 %v70
  %281 = vmatpush.msra.mxu0 %v69
  %282 = vmatpush.msra.mxu0 %v68
  %283 = vmatpush.msra.mxu0 %v67
  %284 = vmatmul.f32.gmra.mxu0 %v197
  %v285 = vpop.f32.mrf.mxu0
  %v286 = vadd.f32 %v78, %v285
  %287 = vmatmul.f32.gmra.mxu0 %v200
  %v288 = vpop.f32.mrf.mxu0
  %v289 = vadd.f32 %v83, %v288
  %290 = vmatmul.f32.gmra.mxu0 %v203
  %v291 = vpop.f32.mrf.mxu0
  %v292 = vadd.f32 %v88, %v291
  %293 = vmatmul.f32.gmra.mxu0 %v206
  %v294 = vpop.f32.mrf.mxu0
  %v295 = vadd.f32 %v93, %v294
  %296 = vmatmul.f32.gmra.mxu0 %v209
  %v297 = vpop.f32.mrf.mxu0
  %v298 = vadd.f32 %v98, %v297
  %299 = vmatmul.f32.gmra.mxu0 %v212
  %v300 = vpop.f32.mrf.mxu0
  %v301 = vadd.f32 %v103, %v300
  %302 = vmatmul.f32.gmra.mxu0 %v215
  %v303 = vpop.f32.mrf.mxu0
  %v304 = vadd.f32 %v108, %v303
  %305 = vmatmul.f32.gmra.mxu0 %v218
  %v306 = vpop.f32.mrf.mxu0
  %v307 = vadd.f32 %v113, %v306
  %308 = vmatmul.f32.gmra.mxu0 %v221
  %v309 = vpop.f32.mrf.mxu0
  %v310 = vadd.f32 %v118, %v309
  %311 = vmatmul.f32.gmra.mxu0 %v224
  %v312 = vpop.f32.mrf.mxu0
  %v313 = vadd.f32 %v123, %v312
  %314 = vmatmul.f32.gmra.mxu0 %v227
  %v315 = vpop.f32.mrf.mxu0
  %v316 = vadd.f32 %v128, %v315
  %317 = vmatmul.f32.gmra.mxu0 %v230
  %v318 = vpop.f32.mrf.mxu0
  %v319 = vadd.f32 %v133, %v318
  %320 = vmatmul.f32.gmra.mxu0 %v233
  %v321 = vpop.f32.mrf.mxu0
  %v322 = vadd.f32 %v138, %v321
  %323 = vmatmul.f32.gmra.mxu0 %v236
  %v324 = vpop.f32.mrf.mxu0
  %v325 = vadd.f32 %v143, %v324
  %326 = vmatmul.f32.gmra.mxu0 %v239
  %v327 = vpop.f32.mrf.mxu0
  %v328 = vadd.f32 %v148, %v327
  %329 = vmatmul.f32.gmra.mxu0 %v242
  %v330 = vpop.f32.mrf.mxu0
  %v331 = vadd.f32 %v153, %v330
  %332 = vmatmul.f32.gmra.mxu0 %v245
  %v333 = vpop.f32.mrf.mxu0
  %v334 = vadd.f32 %v158, %v333
  %335 = vmatmul.f32.gmra.mxu0 %v248
  %v336 = vpop.f32.mrf.mxu0
  %v337 = vadd.f32 %v163, %v336
  %338 = vmatmul.f32.gmra.mxu0 %v251
  %v339 = vpop.f32.mrf.mxu0
  %v340 = vadd.f32 %v168, %v339
  %341 = vmatmul.f32.gmra.mxu0 %v254
  %v342 = vpop.f32.mrf.mxu0
  %v343 = vadd.f32 %v173, %v342
  %344 = vmatmul.f32.gmra.mxu0 %v257
  %v345 = vpop.f32.mrf.mxu0
  %v346 = vadd.f32 %v178, %v345
  %347 = vmatmul.f32.gmra.mxu0 %v260
  %v348 = vpop.f32.mrf.mxu0
  %v349 = vadd.f32 %v183, %v348
  %350 = vmatmul.f32.gmra.mxu0 %v263
  %v351 = vpop.f32.mrf.mxu0
  %v352 = vadd.f32 %v188, %v351
  %353 = vmatmul.f32.gmra.mxu0 %v266
  %v354 = vpop.f32.mrf.mxu0
  %v355 = vadd.f32 %v193, %v354
  %356 = vdwg.mxu0
  %v358 = vsel %vm195, %v286, 0
  %v361 = vsel %vm195, %v289, 0
  %v364 = vsel %vm195, %v292, 0
  %v367 = vsel %vm195, %v295, 0
  %v370 = vsel %vm195, %v298, 0
  %v373 = vsel %vm195, %v301, 0
  %v376 = vsel %vm195, %v304, 0
  %v379 = vsel %vm195, %v307, 0
  %v382 = vsel %vm195, %v310, 0
  %v385 = vsel %vm195, %v313, 0
  %v388 = vsel %vm195, %v316, 0
  %v391 = vsel %vm195, %v319, 0
  %v394 = vsel %vm195, %v322, 0
  %v397 = vsel %vm195, %v325, 0
  %v400 = vsel %vm195, %v328, 0
  %v403 = vsel %vm195, %v331, 0
  %405 = vmatpush.xpose.msra.mxu0 0.0
  %406 = vmatpush.xpose.msra.mxu0 0.0
  %407 = vmatpush.xpose.msra.mxu0 0.0
  %408 = vmatpush.xpose.msra.mxu0 0.0
  %409 = vmatpush.xpose.msra.mxu0 0.0
  %410 = vmatpush.xpose.msra.mxu0 0.0
  %411 = vmatpush.xpose.msra.mxu0 0.0
  %412 = vmatpush.xpose.msra.mxu0 0.0
  %413 = vmatpush.xpose.msra.mxu0 %v403
  %414 = vmatpush.xpose.msra.mxu0 %v400
  %415 = vmatpush.xpose.msra.mxu0 %v397
  %416 = vmatpush.xpose.msra.mxu0 %v394
  %417 = vmatpush.xpose.msra.mxu0 %v391
  %418 = vmatpush.xpose.msra.mxu0 %v388
  %419 = vmatpush.xpose.msra.mxu0 %v385
  %420 = vmatpush.xpose.msra.mxu0 %v382
  %421 = vmatmul.f32.gmra.mxu0 %v358
  %v422 = vpop.f32.mrf.mxu0
  %v423 = vadd.f32 0.0, %v422
  %424 = vmatmul.f32.gmra.mxu0 %v361
  %v425 = vpop.f32.mrf.mxu0
  %v426 = vadd.f32 0.0, %v425
  %427 = vmatmul.f32.gmra.mxu0 %v364
  %v428 = vpop.f32.mrf.mxu0
  %v429 = vadd.f32 0.0, %v428
  %430 = vmatmul.f32.gmra.mxu0 %v367
  %v431 = vpop.f32.mrf.mxu0
  %v432 = vadd.f32 0.0, %v431
  %433 = vmatmul.f32.gmra.mxu0 %v370
  %v434 = vpop.f32.mrf.mxu0
  %v435 = vadd.f32 0.0, %v434
  %436 = vmatmul.f32.gmra.mxu0 %v373
  %v437 = vpop.f32.mrf.mxu0
  %v438 = vadd.f32 0.0, %v437
  %439 = vmatmul.f32.gmra.mxu0 %v376
  %v440 = vpop.f32.mrf.mxu0
  %v441 = vadd.f32 0.0, %v440
  %442 = vmatmul.f32.gmra.mxu0 %v379
  %v443 = vpop.f32.mrf.mxu0
  %v444 = vadd.f32 0.0, %v443
  %445 = vdwg.mxu0
  %v446 = vsel %vm195, %v423, -inf
  %447 = vmax.xlane.f32.xlu0 %v446
  %v448 = vpop.xlane.xlu0 %447
  %v449 = vsel %vm195, %v426, -inf
  %450 = vmax.xlane.f32.xlu0 %v449
  %v451 = vpop.xlane.xlu0 %450
  %v452 = vsel %vm195, %v429, -inf
  %453 = vmax.xlane.f32.xlu0 %v452
  %v454 = vpop.xlane.xlu0 %453
  %v455 = vsel %vm195, %v432, -inf
  %456 = vmax.xlane.f32.xlu0 %v455
  %v457 = vpop.xlane.xlu0 %456
  %v458 = vsel %vm195, %v435, -inf
  %459 = vmax.xlane.f32.xlu0 %v458
  %v460 = vpop.xlane.xlu0 %459
  %v461 = vsel %vm195, %v438, -inf
  %462 = vmax.xlane.f32.xlu0 %v461
  %v463 = vpop.xlane.xlu0 %462
  %v464 = vsel %vm195, %v441, -inf
  %465 = vmax.xlane.f32.xlu0 %v464
  %v466 = vpop.xlane.xlu0 %465
  %v467 = vsel %vm195, %v444, -inf
  %468 = vmax.xlane.f32.xlu0 %v467
  %v469 = vpop.xlane.xlu0 %468
  %v470 = vsub.f32 %v423, %v448
  %v471 = vsub.f32 %v426, %v451
  %v472 = vsub.f32 %v429, %v454
  %v473 = vsub.f32 %v432, %v457
  %v474 = vsub.f32 %v435, %v460
  %v475 = vsub.f32 %v438, %v463
  %v476 = vsub.f32 %v441, %v466
  %v477 = vsub.f32 %v444, %v469
  %v478 = vmul.f32 %v470, 1.442695
  %v479 = vpow.pop %v478
  %v480 = vmul.f32 %v471, 1.442695
  %v481 = vpow.pop %v480
  %v482 = vmul.f32 %v472, 1.442695
  %v483 = vpow.pop %v482
  %v484 = vmul.f32 %v473, 1.442695
  %v485 = vpow.pop %v484
  %v486 = vmul.f32 %v474, 1.442695
  %v487 = vpow.pop %v486
  %v488 = vmul.f32 %v475, 1.442695
  %v489 = vpow.pop %v488
  %v490 = vmul.f32 %v476, 1.442695
  %v491 = vpow.pop %v490
  %v492 = vmul.f32 %v477, 1.442695
  %v493 = vpow.pop %v492
  %v494 = vsel %vm195, %v479, 0.0
  %495 = vadd.xlane.f32.xlu0 %v494
  %v496 = vpop.xlane.xlu0 %495
  %v497 = vsel %vm195, %v481, 0.0
  %498 = vadd.xlane.f32.xlu0 %v497
  %v499 = vpop.xlane.xlu0 %498
  %v500 = vsel %vm195, %v483, 0.0
  %501 = vadd.xlane.f32.xlu0 %v500
  %v502 = vpop.xlane.xlu0 %501
  %v503 = vsel %vm195, %v485, 0.0
  %504 = vadd.xlane.f32.xlu0 %v503
  %v505 = vpop.xlane.xlu0 %504
  %v506 = vsel %vm195, %v487, 0.0
  %507 = vadd.xlane.f32.xlu0 %v506
  %v508 = vpop.xlane.xlu0 %507
  %v509 = vsel %vm195, %v489, 0.0
  %510 = vadd.xlane.f32.xlu0 %v509
  %v511 = vpop.xlane.xlu0 %510
  %v512 = vsel %vm195, %v491, 0.0
  %513 = vadd.xlane.f32.xlu0 %v512
  %v514 = vpop.xlane.xlu0 %513
  %v515 = vsel %vm195, %v493, 0.0
  %516 = vadd.xlane.f32.xlu0 %v515
  %v517 = vpop.xlane.xlu0 %516
  %v518 = vrcp.pop %v496
  %v519 = vrcp.pop %v499
  %v520 = vrcp.pop %v502
  %v521 = vrcp.pop %v505
  %v522 = vrcp.pop %v508
  %v523 = vrcp.pop %v511
  %v524 = vrcp.pop %v514
  %v525 = vrcp.pop %v517
  %v526 = vmul.f32 %v479, %v518
  %v527 = vmul.f32 %v481, %v519
  %v528 = vmul.f32 %v483, %v520
  %v529 = vmul.f32 %v485, %v521
  %v530 = vmul.f32 %v487, %v522
  %v531 = vmul.f32 %v489, %v523
  %v532 = vmul.f32 %v491, %v524
  %v533 = vmul.f32 %v493, %v525
  %v535 = vsel %vm195, %v334, 0
  %v538 = vsel %vm195, %v337, 0
  %v541 = vsel %vm195, %v340, 0
  %v544 = vsel %vm195, %v343, 0
  %v547 = vsel %vm195, %v346, 0
  %v550 = vsel %vm195, %v349, 0
  %v553 = vsel %vm195, %v352, 0
  %v556 = vsel %vm195, %v355, 0
  %v559 = vsel %vm195, %v526, 0
  %v562 = vsel %vm195, %v527, 0
  %v565 = vsel %vm195, %v528, 0
  %v568 = vsel %vm195, %v529, 0
  %v571 = vsel %vm195, %v530, 0
  %v574 = vsel %vm195, %v531, 0
  %v577 = vsel %vm195, %v532, 0
  %v580 = vsel %vm195, %v533, 0
  %582 = vmatpush.xpose.msra.mxu0 0.0
  %583 = vmatpush.xpose.msra.mxu0 0.0
  %584 = vmatpush.xpose.msra.mxu0 0.0
  %585 = vmatpush.xpose.msra.mxu0 0.0
  %586 = vmatpush.xpose.msra.mxu0 0.0
  %587 = vmatpush.xpose.msra.mxu0 0.0
  %588 = vmatpush.xpose.msra.mxu0 0.0
  %589 = vmatpush.xpose.msra.mxu0 0.0
  %590 = vmatpush.xpose.msra.mxu0 %v580
  %591 = vmatpush.xpose.msra.mxu0 %v577
  %592 = vmatpush.xpose.msra.mxu0 %v574
  %593 = vmatpush.xpose.msra.mxu0 %v571
  %594 = vmatpush.xpose.msra.mxu0 %v568
  %595 = vmatpush.xpose.msra.mxu0 %v565
  %596 = vmatpush.xpose.msra.mxu0 %v562
  %597 = vmatpush.xpose.msra.mxu0 %v559
  %598 = vmatmul.f32.gmra.mxu0 %v535
  %v599 = vpop.f32.mrf.mxu0
  %v600 = vadd.f32 0.0, %v599
  %601 = vmatmul.f32.gmra.mxu0 %v538
  %v602 = vpop.f32.mrf.mxu0
  %v603 = vadd.f32 0.0, %v602
  %604 = vmatmul.f32.gmra.mxu0 %v541
  %v605 = vpop.f32.mrf.mxu0
  %v606 = vadd.f32 0.0, %v605
  %607 = vmatmul.f32.gmra.mxu0 %v544
  %v608 = vpop.f32.mrf.mxu0
  %v609 = vadd.f32 0.0, %v608
  %610 = vmatmul.f32.gmra.mxu0 %v547
  %v611 = vpop.f32.mrf.mxu0
  %v612 = vadd.f32 0.0, %v611
  %613 = vmatmul.f32.gmra.mxu0 %v550
  %v614 = vpop.f32.mrf.mxu0
  %v615 = vadd.f32 0.0, %v614
  %616 = vmatmul.f32.gmra.mxu0 %v553
  %v617 = vpop.f32.mrf.mxu0
  %v618 = vadd.f32 0.0, %v617
  %619 = vmatmul.f32.gmra.mxu0 %v556
  %v620 = vpop.f32.mrf.mxu0
  %v621 = vadd.f32 0.0, %v620
  %622 = vdwg.mxu0
  %v623 = vstv %s18
  %v624 = vmul.f32 %v623, %v600
  %v625 = vmul.f32 %v623, %v603
  %v626 = vmul.f32 %v623, %v606
  %v627 = vmul.f32 %v623, %v609
  %v628 = vmul.f32 %v623, %v612
  %v629 = vmul.f32 %v623, %v615
  %v630 = vmul.f32 %v623, %v618
  %v631 = vmul.f32 %v623, %v621
  %v632 = vadd.f32 %v624, %v67
  %v633 = vadd.f32 %v625, %v68
  %v634 = vadd.f32 %v626, %v69
  %v635 = vadd.f32 %v627, %v70
  %v636 = vadd.f32 %v628, %v71
  %v637 = vadd.f32 %v629, %v72
  %v638 = vadd.f32 %v630, %v73
  %v639 = vadd.f32 %v631, %v74
  %640 = vst.msk [vmem:[%s4] sm:$0xff] %vm195, %v632
  %641 = vst.msk [vmem:[%s4 + $0x8] sm:$0xff] %vm195, %v633
  %642 = vst.msk [vmem:[%s4 + $0x10] sm:$0xff] %vm195, %v634
  %643 = vst.msk [vmem:[%s4 + $0x18] sm:$0xff] %vm195, %v635
  %644 = vst.msk [vmem:[%s4 + $0x20] sm:$0xff] %vm195, %v636
  %645 = vst.msk [vmem:[%s4 + $0x28] sm:$0xff] %vm195, %v637
  %646 = vst.msk [vmem:[%s4 + $0x30] sm:$0xff] %vm195, %v638
  %647 = vst.msk [vmem:[%s4 + $0x38] sm:$0xff] %vm195, %v639
  %s648 = scalar_lea.vmem %s0, 64
  %v649 = vld [vmem:[%s648] sm:$0xff]
  %v650 = vld [vmem:[%s648 + $0x8] sm:$0xff]
  %v651 = vld [vmem:[%s648 + $0x10] sm:$0xff]
  %v652 = vld [vmem:[%s648 + $0x18] sm:$0xff]
  %v653 = vld [vmem:[%s648 + $0x20] sm:$0xff]
  %v654 = vld [vmem:[%s648 + $0x28] sm:$0xff]
  %v655 = vld [vmem:[%s648 + $0x30] sm:$0xff]
  %v656 = vld [vmem:[%s648 + $0x38] sm:$0xff]
  %657 = vmatpush.msra.mxu0 0.0
  %658 = vmatpush.msra.mxu0 0.0
  %659 = vmatpush.msra.mxu0 0.0
  %660 = vmatpush.msra.mxu0 0.0
  %661 = vmatpush.msra.mxu0 0.0
  %662 = vmatpush.msra.mxu0 0.0
  %663 = vmatpush.msra.mxu0 0.0
  %664 = vmatpush.msra.mxu0 0.0
  %665 = vmatpush.msra.mxu0 %v656
  %666 = vmatpush.msra.mxu0 %v655
  %667 = vmatpush.msra.mxu0 %v654
  %668 = vmatpush.msra.mxu0 %v653
  %669 = vmatpush.msra.mxu0 %v652
  %670 = vmatpush.msra.mxu0 %v651
  %671 = vmatpush.msra.mxu0 %v650
  %672 = vmatpush.msra.mxu0 %v649
  %673 = vmatmul.f32.gmra.mxu0 %v197
  %v674 = vpop.f32.mrf.mxu0
  %v675 = vadd.f32 %v78, %v674
  %676 = vmatmul.f32.gmra.mxu0 %v200
  %v677 = vpop.f32.mrf.mxu0
  %v678 = vadd.f32 %v83, %v677
  %679 = vmatmul.f32.gmra.mxu0 %v203
  %v680 = vpop.f32.mrf.mxu0
  %v681 = vadd.f32 %v88, %v680
  %682 = vmatmul.f32.gmra.mxu0 %v206
  %v683 = vpop.f32.mrf.mxu0
  %v684 = vadd.f32 %v93, %v683
  %685 = vmatmul.f32.gmra.mxu0 %v209
  %v686 = vpop.f32.mrf.mxu0
  %v687 = vadd.f32 %v98, %v686
  %688 = vmatmul.f32.gmra.mxu0 %v212
  %v689 = vpop.f32.mrf.mxu0
  %v690 = vadd.f32 %v103, %v689
  %691 = vmatmul.f32.gmra.mxu0 %v215
  %v692 = vpop.f32.mrf.mxu0
  %v693 = vadd.f32 %v108, %v692
  %694 = vmatmul.f32.gmra.mxu0 %v218
  %v695 = vpop.f32.mrf.mxu0
  %v696 = vadd.f32 %v113, %v695
  %697 = vmatmul.f32.gmra.mxu0 %v221
  %v698 = vpop.f32.mrf.mxu0
  %v699 = vadd.f32 %v118, %v698
  %700 = vmatmul.f32.gmra.mxu0 %v224
  %v701 = vpop.f32.mrf.mxu0
  %v702 = vadd.f32 %v123, %v701
  %703 = vmatmul.f32.gmra.mxu0 %v227
  %v704 = vpop.f32.mrf.mxu0
  %v705 = vadd.f32 %v128, %v704
  %706 = vmatmul.f32.gmra.mxu0 %v230
  %v707 = vpop.f32.mrf.mxu0
  %v708 = vadd.f32 %v133, %v707
  %709 = vmatmul.f32.gmra.mxu0 %v233
  %v710 = vpop.f32.mrf.mxu0
  %v711 = vadd.f32 %v138, %v710
  %712 = vmatmul.f32.gmra.mxu0 %v236
  %v713 = vpop.f32.mrf.mxu0
  %v714 = vadd.f32 %v143, %v713
  %715 = vmatmul.f32.gmra.mxu0 %v239
  %v716 = vpop.f32.mrf.mxu0
  %v717 = vadd.f32 %v148, %v716
  %718 = vmatmul.f32.gmra.mxu0 %v242
  %v719 = vpop.f32.mrf.mxu0
  %v720 = vadd.f32 %v153, %v719
  %721 = vmatmul.f32.gmra.mxu0 %v245
  %v722 = vpop.f32.mrf.mxu0
  %v723 = vadd.f32 %v158, %v722
  %724 = vmatmul.f32.gmra.mxu0 %v248
  %v725 = vpop.f32.mrf.mxu0
  %v726 = vadd.f32 %v163, %v725
  %727 = vmatmul.f32.gmra.mxu0 %v251
  %v728 = vpop.f32.mrf.mxu0
  %v729 = vadd.f32 %v168, %v728
  %730 = vmatmul.f32.gmra.mxu0 %v254
  %v731 = vpop.f32.mrf.mxu0
  %v732 = vadd.f32 %v173, %v731
  %733 = vmatmul.f32.gmra.mxu0 %v257
  %v734 = vpop.f32.mrf.mxu0
  %v735 = vadd.f32 %v178, %v734
  %736 = vmatmul.f32.gmra.mxu0 %v260
  %v737 = vpop.f32.mrf.mxu0
  %v738 = vadd.f32 %v183, %v737
  %739 = vmatmul.f32.gmra.mxu0 %v263
  %v740 = vpop.f32.mrf.mxu0
  %v741 = vadd.f32 %v188, %v740
  %742 = vmatmul.f32.gmra.mxu0 %v266
  %v743 = vpop.f32.mrf.mxu0
  %v744 = vadd.f32 %v193, %v743
  %745 = vdwg.mxu0
  %v747 = vsel %vm195, %v675, 0
  %v750 = vsel %vm195, %v678, 0
  %v753 = vsel %vm195, %v681, 0
  %v756 = vsel %vm195, %v684, 0
  %v759 = vsel %vm195, %v687, 0
  %v762 = vsel %vm195, %v690, 0
  %v765 = vsel %vm195, %v693, 0
  %v768 = vsel %vm195, %v696, 0
  %v771 = vsel %vm195, %v699, 0
  %v774 = vsel %vm195, %v702, 0
  %v777 = vsel %vm195, %v705, 0
  %v780 = vsel %vm195, %v708, 0
  %v783 = vsel %vm195, %v711, 0
  %v786 = vsel %vm195, %v714, 0
  %v789 = vsel %vm195, %v717, 0
  %v792 = vsel %vm195, %v720, 0
  %794 = vmatpush.xpose.msra.mxu0 0.0
  %795 = vmatpush.xpose.msra.mxu0 0.0
  %796 = vmatpush.xpose.msra.mxu0 0.0
  %797 = vmatpush.xpose.msra.mxu0 0.0
  %798 = vmatpush.xpose.msra.mxu0 0.0
  %799 = vmatpush.xpose.msra.mxu0 0.0
  %800 = vmatpush.xpose.msra.mxu0 0.0
  %801 = vmatpush.xpose.msra.mxu0 0.0
  %802 = vmatpush.xpose.msra.mxu0 %v792
  %803 = vmatpush.xpose.msra.mxu0 %v789
  %804 = vmatpush.xpose.msra.mxu0 %v786
  %805 = vmatpush.xpose.msra.mxu0 %v783
  %806 = vmatpush.xpose.msra.mxu0 %v780
  %807 = vmatpush.xpose.msra.mxu0 %v777
  %808 = vmatpush.xpose.msra.mxu0 %v774
  %809 = vmatpush.xpose.msra.mxu0 %v771
  %810 = vmatmul.f32.gmra.mxu0 %v747
  %v811 = vpop.f32.mrf.mxu0
  %v812 = vadd.f32 0.0, %v811
  %813 = vmatmul.f32.gmra.mxu0 %v750
  %v814 = vpop.f32.mrf.mxu0
  %v815 = vadd.f32 0.0, %v814
  %816 = vmatmul.f32.gmra.mxu0 %v753
  %v817 = vpop.f32.mrf.mxu0
  %v818 = vadd.f32 0.0, %v817
  %819 = vmatmul.f32.gmra.mxu0 %v756
  %v820 = vpop.f32.mrf.mxu0
  %v821 = vadd.f32 0.0, %v820
  %822 = vmatmul.f32.gmra.mxu0 %v759
  %v823 = vpop.f32.mrf.mxu0
  %v824 = vadd.f32 0.0, %v823
  %825 = vmatmul.f32.gmra.mxu0 %v762
  %v826 = vpop.f32.mrf.mxu0
  %v827 = vadd.f32 0.0, %v826
  %828 = vmatmul.f32.gmra.mxu0 %v765
  %v829 = vpop.f32.mrf.mxu0
  %v830 = vadd.f32 0.0, %v829
  %831 = vmatmul.f32.gmra.mxu0 %v768
  %v832 = vpop.f32.mrf.mxu0
  %v833 = vadd.f32 0.0, %v832
  %834 = vdwg.mxu0
  %v835 = vsel %vm195, %v812, -inf
  %836 = vmax.xlane.f32.xlu0 %v835
  %v837 = vpop.xlane.xlu0 %836
  %v838 = vsel %vm195, %v815, -inf
  %839 = vmax.xlane.f32.xlu0 %v838
  %v840 = vpop.xlane.xlu0 %839
  %v841 = vsel %vm195, %v818, -inf
  %842 = vmax.xlane.f32.xlu0 %v841
  %v843 = vpop.xlane.xlu0 %842
  %v844 = vsel %vm195, %v821, -inf
  %845 = vmax.xlane.f32.xlu0 %v844
  %v846 = vpop.xlane.xlu0 %845
  %v847 = vsel %vm195, %v824, -inf
  %848 = vmax.xlane.f32.xlu0 %v847
  %v849 = vpop.xlane.xlu0 %848
  %v850 = vsel %vm195, %v827, -inf
  %851 = vmax.xlane.f32.xlu0 %v850
  %v852 = vpop.xlane.xlu0 %851
  %v853 = vsel %vm195, %v830, -inf
  %854 = vmax.xlane.f32.xlu0 %v853
  %v855 = vpop.xlane.xlu0 %854
  %v856 = vsel %vm195, %v833, -inf
  %857 = vmax.xlane.f32.xlu0 %v856
  %v858 = vpop.xlane.xlu0 %857
  %v859 = vsub.f32 %v812, %v837
  %v860 = vsub.f32 %v815, %v840
  %v861 = vsub.f32 %v818, %v843
  %v862 = vsub.f32 %v821, %v846
  %v863 = vsub.f32 %v824, %v849
  %v864 = vsub.f32 %v827, %v852
  %v865 = vsub.f32 %v830, %v855
  %v866 = vsub.f32 %v833, %v858
  %v867 = vmul.f32 %v859, 1.442695
  %v868 = vpow.pop %v867
  %v869 = vmul.f32 %v860, 1.442695
  %v870 = vpow.pop %v869
  %v871 = vmul.f32 %v861, 1.442695
  %v872 = vpow.pop %v871
  %v873 = vmul.f32 %v862, 1.442695
  %v874 = vpow.pop %v873
  %v875 = vmul.f32 %v863, 1.442695
  %v876 = vpow.pop %v875
  %v877 = vmul.f32 %v864, 1.442695
  %v878 = vpow.pop %v877
  %v879 = vmul.f32 %v865, 1.442695
  %v880 = vpow.pop %v879
  %v881 = vmul.f32 %v866, 1.442695
  %v882 = vpow.pop %v881
  %v883 = vsel %vm195, %v868, 0.0
  %884 = vadd.xlane.f32.xlu0 %v883
  %v885 = vpop.xlane.xlu0 %884
  %v886 = vsel %vm195, %v870, 0.0
  %887 = vadd.xlane.f32.xlu0 %v886
  %v888 = vpop.xlane.xlu0 %887
  %v889 = vsel %vm195, %v872, 0.0
  %890 = vadd.xlane.f32.xlu0 %v889
  %v891 = vpop.xlane.xlu0 %890
  %v892 = vsel %vm195, %v874, 0.0
  %893 = vadd.xlane.f32.xlu0 %v892
  %v894 = vpop.xlane.xlu0 %893
  %v895 = vsel %vm195, %v876, 0.0
  %896 = vadd.xlane.f32.xlu0 %v895
  %v897 = vpop.xlane.xlu0 %896
  %v898 = vsel %vm195, %v878, 0.0
  %899 = vadd.xlane.f32.xlu0 %v898
  %v900 = vpop.xlane.xlu0 %899
  %v901 = vsel %vm195, %v880, 0.0
  %902 = vadd.xlane.f32.xlu0 %v901
  %v903 = vpop.xlane.xlu0 %902
  %v904 = vsel %vm195, %v882, 0.0
  %905 = vadd.xlane.f32.xlu0 %v904
  %v906 = vpop.xlane.xlu0 %905
  %v907 = vrcp.pop %v885
  %v908 = vrcp.pop %v888
  %v909 = vrcp.pop %v891
  %v910 = vrcp.pop %v894
  %v911 = vrcp.pop %v897
  %v912 = vrcp.pop %v900
  %v913 = vrcp.pop %v903
  %v914 = vrcp.pop %v906
  %v915 = vmul.f32 %v868, %v907
  %v916 = vmul.f32 %v870, %v908
  %v917 = vmul.f32 %v872, %v909
  %v918 = vmul.f32 %v874, %v910
  %v919 = vmul.f32 %v876, %v911
  %v920 = vmul.f32 %v878, %v912
  %v921 = vmul.f32 %v880, %v913
  %v922 = vmul.f32 %v882, %v914
  %v924 = vsel %vm195, %v723, 0
  %v927 = vsel %vm195, %v726, 0
  %v930 = vsel %vm195, %v729, 0
  %v933 = vsel %vm195, %v732, 0
  %v936 = vsel %vm195, %v735, 0
  %v939 = vsel %vm195, %v738, 0
  %v942 = vsel %vm195, %v741, 0
  %v945 = vsel %vm195, %v744, 0
  %v948 = vsel %vm195, %v915, 0
  %v951 = vsel %vm195, %v916, 0
  %v954 = vsel %vm195, %v917, 0
  %v957 = vsel %vm195, %v918, 0
  %v960 = vsel %vm195, %v919, 0
  %v963 = vsel %vm195, %v920, 0
  %v966 = vsel %vm195, %v921, 0
  %v969 = vsel %vm195, %v922, 0
  %971 = vmatpush.xpose.msra.mxu0 0.0
  %972 = vmatpush.xpose.msra.mxu0 0.0
  %973 = vmatpush.xpose.msra.mxu0 0.0
  %974 = vmatpush.xpose.msra.mxu0 0.0
  %975 = vmatpush.xpose.msra.mxu0 0.0
  %976 = vmatpush.xpose.msra.mxu0 0.0
  %977 = vmatpush.xpose.msra.mxu0 0.0
  %978 = vmatpush.xpose.msra.mxu0 0.0
  %979 = vmatpush.xpose.msra.mxu0 %v969
  %980 = vmatpush.xpose.msra.mxu0 %v966
  %981 = vmatpush.xpose.msra.mxu0 %v963
  %982 = vmatpush.xpose.msra.mxu0 %v960
  %983 = vmatpush.xpose.msra.mxu0 %v957
  %984 = vmatpush.xpose.msra.mxu0 %v954
  %985 = vmatpush.xpose.msra.mxu0 %v951
  %986 = vmatpush.xpose.msra.mxu0 %v948
  %987 = vmatmul.f32.gmra.mxu0 %v924
  %v988 = vpop.f32.mrf.mxu0
  %v989 = vadd.f32 0.0, %v988
  %990 = vmatmul.f32.gmra.mxu0 %v927
  %v991 = vpop.f32.mrf.mxu0
  %v992 = vadd.f32 0.0, %v991
  %993 = vmatmul.f32.gmra.mxu0 %v930
  %v994 = vpop.f32.mrf.mxu0
  %v995 = vadd.f32 0.0, %v994
  %996 = vmatmul.f32.gmra.mxu0 %v933
  %v997 = vpop.f32.mrf.mxu0
  %v998 = vadd.f32 0.0, %v997
  %999 = vmatmul.f32.gmra.mxu0 %v936
  %v1000 = vpop.f32.mrf.mxu0
  %v1001 = vadd.f32 0.0, %v1000
  %1002 = vmatmul.f32.gmra.mxu0 %v939
  %v1003 = vpop.f32.mrf.mxu0
  %v1004 = vadd.f32 0.0, %v1003
  %1005 = vmatmul.f32.gmra.mxu0 %v942
  %v1006 = vpop.f32.mrf.mxu0
  %v1007 = vadd.f32 0.0, %v1006
  %1008 = vmatmul.f32.gmra.mxu0 %v945
  %v1009 = vpop.f32.mrf.mxu0
  %v1010 = vadd.f32 0.0, %v1009
  %1011 = vdwg.mxu0
  %v1012 = vmul.f32 %v623, %v989
  %v1013 = vmul.f32 %v623, %v992
  %v1014 = vmul.f32 %v623, %v995
  %v1015 = vmul.f32 %v623, %v998
  %v1016 = vmul.f32 %v623, %v1001
  %v1017 = vmul.f32 %v623, %v1004
  %v1018 = vmul.f32 %v623, %v1007
  %v1019 = vmul.f32 %v623, %v1010
  %v1020 = vadd.f32 %v1012, %v649
  %v1021 = vadd.f32 %v1013, %v650
  %v1022 = vadd.f32 %v1014, %v651
  %v1023 = vadd.f32 %v1015, %v652
  %v1024 = vadd.f32 %v1016, %v653
  %v1025 = vadd.f32 %v1017, %v654
  %v1026 = vadd.f32 %v1018, %v655
  %v1027 = vadd.f32 %v1019, %v656
  %s1028 = scalar_lea.vmem %s4, 64
  %1029 = vst.msk [vmem:[%s1028] sm:$0xff] %vm195, %v1020
  %1030 = vst.msk [vmem:[%s1028 + $0x8] sm:$0xff] %vm195, %v1021
  %1031 = vst.msk [vmem:[%s1028 + $0x10] sm:$0xff] %vm195, %v1022
  %1032 = vst.msk [vmem:[%s1028 + $0x18] sm:$0xff] %vm195, %v1023
  %1033 = vst.msk [vmem:[%s1028 + $0x20] sm:$0xff] %vm195, %v1024
  %1034 = vst.msk [vmem:[%s1028 + $0x28] sm:$0xff] %vm195, %v1025
  %1035 = vst.msk [vmem:[%s1028 + $0x30] sm:$0xff] %vm195, %v1026
  %1036 = vst.msk [vmem:[%s1028 + $0x38] sm:$0xff] %vm195, %v1027
  %s1037 = scalar_lea.vmem %s0, 128
  %v1038 = vld [vmem:[%s1037] sm:$0xff]
  %v1039 = vld [vmem:[%s1037 + $0x8] sm:$0xff]
  %v1040 = vld [vmem:[%s1037 + $0x10] sm:$0xff]
  %v1041 = vld [vmem:[%s1037 + $0x18] sm:$0xff]
  %v1042 = vld [vmem:[%s1037 + $0x20] sm:$0xff]
  %v1043 = vld [vmem:[%s1037 + $0x28] sm:$0xff]
  %v1044 = vld [vmem:[%s1037 + $0x30] sm:$0xff]
  %v1045 = vld [vmem:[%s1037 + $0x38] sm:$0xff]
  %1046 = vmatpush.msra.mxu0 0.0
  %1047 = vmatpush.msra.mxu0 0.0
  %1048 = vmatpush.msra.mxu0 0.0
  %1049 = vmatpush.msra.mxu0 0.0
  %1050 = vmatpush.msra.mxu0 0.0
  %1051 = vmatpush.msra.mxu0 0.0
  %1052 = vmatpush.msra.mxu0 0.0
  %1053 = vmatpush.msra.mxu0 0.0
  %1054 = vmatpush.msra.mxu0 %v1045
  %1055 = vmatpush.msra.mxu0 %v1044
  %1056 = vmatpush.msra.mxu0 %v1043
  %1057 = vmatpush.msra.mxu0 %v1042
  %1058 = vmatpush.msra.mxu0 %v1041
  %1059 = vmatpush.msra.mxu0 %v1040
  %1060 = vmatpush.msra.mxu0 %v1039
  %1061 = vmatpush.msra.mxu0 %v1038
  %1062 = vmatmul.f32.gmra.mxu0 %v197
  %v1063 = vpop.f32.mrf.mxu0
  %v1064 = vadd.f32 %v78, %v1063
  %1065 = vmatmul.f32.gmra.mxu0 %v200
  %v1066 = vpop.f32.mrf.mxu0
  %v1067 = vadd.f32 %v83, %v1066
  %1068 = vmatmul.f32.gmra.mxu0 %v203
  %v1069 = vpop.f32.mrf.mxu0
  %v1070 = vadd.f32 %v88, %v1069
  %1071 = vmatmul.f32.gmra.mxu0 %v206
  %v1072 = vpop.f32.mrf.mxu0
  %v1073 = vadd.f32 %v93, %v1072
  %1074 = vmatmul.f32.gmra.mxu0 %v209
  %v1075 = vpop.f32.mrf.mxu0
  %v1076 = vadd.f32 %v98, %v1075
  %1077 = vmatmul.f32.gmra.mxu0 %v212
  %v1078 = vpop.f32.mrf.mxu0
  %v1079 = vadd.f32 %v103, %v1078
  %1080 = vmatmul.f32.gmra.mxu0 %v215
  %v1081 = vpop.f32.mrf.mxu0
  %v1082 = vadd.f32 %v108, %v1081
  %1083 = vmatmul.f32.gmra.mxu0 %v218
  %v1084 = vpop.f32.mrf.mxu0
  %v1085 = vadd.f32 %v113, %v1084
  %1086 = vmatmul.f32.gmra.mxu0 %v221
  %v1087 = vpop.f32.mrf.mxu0
  %v1088 = vadd.f32 %v118, %v1087
  %1089 = vmatmul.f32.gmra.mxu0 %v224
  %v1090 = vpop.f32.mrf.mxu0
  %v1091 = vadd.f32 %v123, %v1090
  %1092 = vmatmul.f32.gmra.mxu0 %v227
  %v1093 = vpop.f32.mrf.mxu0
  %v1094 = vadd.f32 %v128, %v1093
  %1095 = vmatmul.f32.gmra.mxu0 %v230
  %v1096 = vpop.f32.mrf.mxu0
  %v1097 = vadd.f32 %v133, %v1096
  %1098 = vmatmul.f32.gmra.mxu0 %v233
  %v1099 = vpop.f32.mrf.mxu0
  %v1100 = vadd.f32 %v138, %v1099
  %1101 = vmatmul.f32.gmra.mxu0 %v236
  %v1102 = vpop.f32.mrf.mxu0
  %v1103 = vadd.f32 %v143, %v1102
  %1104 = vmatmul.f32.gmra.mxu0 %v239
  %v1105 = vpop.f32.mrf.mxu0
  %v1106 = vadd.f32 %v148, %v1105
  %1107 = vmatmul.f32.gmra.mxu0 %v242
  %v1108 = vpop.f32.mrf.mxu0
  %v1109 = vadd.f32 %v153, %v1108
  %1110 = vmatmul.f32.gmra.mxu0 %v245
  %v1111 = vpop.f32.mrf.mxu0
  %v1112 = vadd.f32 %v158, %v1111
  %1113 = vmatmul.f32.gmra.mxu0 %v248
  %v1114 = vpop.f32.mrf.mxu0
  %v1115 = vadd.f32 %v163, %v1114
  %1116 = vmatmul.f32.gmra.mxu0 %v251
  %v1117 = vpop.f32.mrf.mxu0
  %v1118 = vadd.f32 %v168, %v1117
  %1119 = vmatmul.f32.gmra.mxu0 %v254
  %v1120 = vpop.f32.mrf.mxu0
  %v1121 = vadd.f32 %v173, %v1120
  %1122 = vmatmul.f32.gmra.mxu0 %v257
  %v1123 = vpop.f32.mrf.mxu0
  %v1124 = vadd.f32 %v178, %v1123
  %1125 = vmatmul.f32.gmra.mxu0 %v260
  %v1126 = vpop.f32.mrf.mxu0
  %v1127 = vadd.f32 %v183, %v1126
  %1128 = vmatmul.f32.gmra.mxu0 %v263
  %v1129 = vpop.f32.mrf.mxu0
  %v1130 = vadd.f32 %v188, %v1129
  %1131 = vmatmul.f32.gmra.mxu0 %v266
  %v1132 = vpop.f32.mrf.mxu0
  %v1133 = vadd.f32 %v193, %v1132
  %1134 = vdwg.mxu0
  %v1136 = vsel %vm195, %v1064, 0
  %v1139 = vsel %vm195, %v1067, 0
  %v1142 = vsel %vm195, %v1070, 0
  %v1145 = vsel %vm195, %v1073, 0
  %v1148 = vsel %vm195, %v1076, 0
  %v1151 = vsel %vm195, %v1079, 0
  %v1154 = vsel %vm195, %v1082, 0
  %v1157 = vsel %vm195, %v1085, 0
  %v1160 = vsel %vm195, %v1088, 0
  %v1163 = vsel %vm195, %v1091, 0
  %v1166 = vsel %vm195, %v1094, 0
  %v1169 = vsel %vm195, %v1097, 0
  %v1172 = vsel %vm195, %v1100, 0
  %v1175 = vsel %vm195, %v1103, 0
  %v1178 = vsel %vm195, %v1106, 0
  %v1181 = vsel %vm195, %v1109, 0
  %1183 = vmatpush.xpose.msra.mxu0 0.0
  %1184 = vmatpush.xpose.msra.mxu0 0.0
  %1185 = vmatpush.xpose.msra.mxu0 0.0
  %1186 = vmatpush.xpose.msra.mxu0 0.0
  %1187 = vmatpush.xpose.msra.mxu0 0.0
  %1188 = vmatpush.xpose.msra.mxu0 0.0
  %1189 = vmatpush.xpose.msra.mxu0 0.0
  %1190 = vmatpush.xpose.msra.mxu0 0.0
  %1191 = vmatpush.xpose.msra.mxu0 %v1181
  %1192 = vmatpush.xpose.msra.mxu0 %v1178
  %1193 = vmatpush.xpose.msra.mxu0 %v1175
  %1194 = vmatpush.xpose.msra.mxu0 %v1172
  %1195 = vmatpush.xpose.msra.mxu0 %v1169
  %1196 = vmatpush.xpose.msra.mxu0 %v1166
  %1197 = vmatpush.xpose.msra.mxu0 %v1163
  %1198 = vmatpush.xpose.msra.mxu0 %v1160
  %1199 = vmatmul.f32.gmra.mxu0 %v1136
  %v1200 = vpop.f32.mrf.mxu0
  %v1201 = vadd.f32 0.0, %v1200
  %1202 = vmatmul.f32.gmra.mxu0 %v1139
  %v1203 = vpop.f32.mrf.mxu0
  %v1204 = vadd.f32 0.0, %v1203
  %1205 = vmatmul.f32.gmra.mxu0 %v1142
  %v1206 = vpop.f32.mrf.mxu0
  %v1207 = vadd.f32 0.0, %v1206
  %1208 = vmatmul.f32.gmra.mxu0 %v1145
  %v1209 = vpop.f32.mrf.mxu0
  %v1210 = vadd.f32 0.0, %v1209
  %1211 = vmatmul.f32.gmra.mxu0 %v1148
  %v1212 = vpop.f32.mrf.mxu0
  %v1213 = vadd.f32 0.0, %v1212
  %1214 = vmatmul.f32.gmra.mxu0 %v1151
  %v1215 = vpop.f32.mrf.mxu0
  %v1216 = vadd.f32 0.0, %v1215
  %1217 = vmatmul.f32.gmra.mxu0 %v1154
  %v1218 = vpop.f32.mrf.mxu0
  %v1219 = vadd.f32 0.0, %v1218
  %1220 = vmatmul.f32.gmra.mxu0 %v1157
  %v1221 = vpop.f32.mrf.mxu0
  %v1222 = vadd.f32 0.0, %v1221
  %1223 = vdwg.mxu0
  %v1224 = vsel %vm195, %v1201, -inf
  %1225 = vmax.xlane.f32.xlu0 %v1224
  %v1226 = vpop.xlane.xlu0 %1225
  %v1227 = vsel %vm195, %v1204, -inf
  %1228 = vmax.xlane.f32.xlu0 %v1227
  %v1229 = vpop.xlane.xlu0 %1228
  %v1230 = vsel %vm195, %v1207, -inf
  %1231 = vmax.xlane.f32.xlu0 %v1230
  %v1232 = vpop.xlane.xlu0 %1231
  %v1233 = vsel %vm195, %v1210, -inf
  %1234 = vmax.xlane.f32.xlu0 %v1233
  %v1235 = vpop.xlane.xlu0 %1234
  %v1236 = vsel %vm195, %v1213, -inf
  %1237 = vmax.xlane.f32.xlu0 %v1236
  %v1238 = vpop.xlane.xlu0 %1237
  %v1239 = vsel %vm195, %v1216, -inf
  %1240 = vmax.xlane.f32.xlu0 %v1239
  %v1241 = vpop.xlane.xlu0 %1240
  %v1242 = vsel %vm195, %v1219, -inf
  %1243 = vmax.xlane.f32.xlu0 %v1242
  %v1244 = vpop.xlane.xlu0 %1243
  %v1245 = vsel %vm195, %v1222, -inf
  %1246 = vmax.xlane.f32.xlu0 %v1245
  %v1247 = vpop.xlane.xlu0 %1246
  %v1248 = vsub.f32 %v1201, %v1226
  %v1249 = vsub.f32 %v1204, %v1229
  %v1250 = vsub.f32 %v1207, %v1232
  %v1251 = vsub.f32 %v1210, %v1235
  %v1252 = vsub.f32 %v1213, %v1238
  %v1253 = vsub.f32 %v1216, %v1241
  %v1254 = vsub.f32 %v1219, %v1244
  %v1255 = vsub.f32 %v1222, %v1247
  %v1256 = vmul.f32 %v1248, 1.442695
  %v1257 = vpow.pop %v1256
  %v1258 = vmul.f32 %v1249, 1.442695
  %v1259 = vpow.pop %v1258
  %v1260 = vmul.f32 %v1250, 1.442695
  %v1261 = vpow.pop %v1260
  %v1262 = vmul.f32 %v1251, 1.442695
  %v1263 = vpow.pop %v1262
  %v1264 = vmul.f32 %v1252, 1.442695
  %v1265 = vpow.pop %v1264
  %v1266 = vmul.f32 %v1253, 1.442695
  %v1267 = vpow.pop %v1266
  %v1268 = vmul.f32 %v1254, 1.442695
  %v1269 = vpow.pop %v1268
  %v1270 = vmul.f32 %v1255, 1.442695
  %v1271 = vpow.pop %v1270
  %v1272 = vsel %vm195, %v1257, 0.0
  %1273 = vadd.xlane.f32.xlu0 %v1272
  %v1274 = vpop.xlane.xlu0 %1273
  %v1275 = vsel %vm195, %v1259, 0.0
  %1276 = vadd.xlane.f32.xlu0 %v1275
  %v1277 = vpop.xlane.xlu0 %1276
  %v1278 = vsel %vm195, %v1261, 0.0
  %1279 = vadd.xlane.f32.xlu0 %v1278
  %v1280 = vpop.xlane.xlu0 %1279
  %v1281 = vsel %vm195, %v1263, 0.0
  %1282 = vadd.xlane.f32.xlu0 %v1281
  %v1283 = vpop.xlane.xlu0 %1282
  %v1284 = vsel %vm195, %v1265, 0.0
  %1285 = vadd.xlane.f32.xlu0 %v1284
  %v1286 = vpop.xlane.xlu0 %1285
  %v1287 = vsel %vm195, %v1267, 0.0
  %1288 = vadd.xlane.f32.xlu0 %v1287
  %v1289 = vpop.xlane.xlu0 %1288
  %v1290 = vsel %vm195, %v1269, 0.0
  %1291 = vadd.xlane.f32.xlu0 %v1290
  %v1292 = vpop.xlane.xlu0 %1291
  %v1293 = vsel %vm195, %v1271, 0.0
  %1294 = vadd.xlane.f32.xlu0 %v1293
  %v1295 = vpop.xlane.xlu0 %1294
  %v1296 = vrcp.pop %v1274
  %v1297 = vrcp.pop %v1277
  %v1298 = vrcp.pop %v1280
  %v1299 = vrcp.pop %v1283
  %v1300 = vrcp.pop %v1286
  %v1301 = vrcp.pop %v1289
  %v1302 = vrcp.pop %v1292
  %v1303 = vrcp.pop %v1295
  %v1304 = vmul.f32 %v1257, %v1296
  %v1305 = vmul.f32 %v1259, %v1297
  %v1306 = vmul.f32 %v1261, %v1298
  %v1307 = vmul.f32 %v1263, %v1299
  %v1308 = vmul.f32 %v1265, %v1300
  %v1309 = vmul.f32 %v1267, %v1301
  %v1310 = vmul.f32 %v1269, %v1302
  %v1311 = vmul.f32 %v1271, %v1303
  %v1313 = vsel %vm195, %v1112, 0
  %v1316 = vsel %vm195, %v1115, 0
  %v1319 = vsel %vm195, %v1118, 0
  %v1322 = vsel %vm195, %v1121, 0
  %v1325 = vsel %vm195, %v1124, 0
  %v1328 = vsel %vm195, %v1127, 0
  %v1331 = vsel %vm195, %v1130, 0
  %v1334 = vsel %vm195, %v1133, 0
  %v1337 = vsel %vm195, %v1304, 0
  %v1340 = vsel %vm195, %v1305, 0
  %v1343 = vsel %vm195, %v1306, 0
  %v1346 = vsel %vm195, %v1307, 0
  %v1349 = vsel %vm195, %v1308, 0
  %v1352 = vsel %vm195, %v1309, 0
  %v1355 = vsel %vm195, %v1310, 0
  %v1358 = vsel %vm195, %v1311, 0
  %1360 = vmatpush.xpose.msra.mxu0 0.0
  %1361 = vmatpush.xpose.msra.mxu0 0.0
  %1362 = vmatpush.xpose.msra.mxu0 0.0
  %1363 = vmatpush.xpose.msra.mxu0 0.0
  %1364 = vmatpush.xpose.msra.mxu0 0.0
  %1365 = vmatpush.xpose.msra.mxu0 0.0
  %1366 = vmatpush.xpose.msra.mxu0 0.0
  %1367 = vmatpush.xpose.msra.mxu0 0.0
  %1368 = vmatpush.xpose.msra.mxu0 %v1358
  %1369 = vmatpush.xpose.msra.mxu0 %v1355
  %1370 = vmatpush.xpose.msra.mxu0 %v1352
  %1371 = vmatpush.xpose.msra.mxu0 %v1349
  %1372 = vmatpush.xpose.msra.mxu0 %v1346
  %1373 = vmatpush.xpose.msra.mxu0 %v1343
  %1374 = vmatpush.xpose.msra.mxu0 %v1340
  %1375 = vmatpush.xpose.msra.mxu0 %v1337
  %1376 = vmatmul.f32.gmra.mxu0 %v1313
  %v1377 = vpop.f32.mrf.mxu0
  %v1378 = vadd.f32 0.0, %v1377
  %1379 = vmatmul.f32.gmra.mxu0 %v1316
  %v1380 = vpop.f32.mrf.mxu0
  %v1381 = vadd.f32 0.0, %v1380
  %1382 = vmatmul.f32.gmra.mxu0 %v1319
  %v1383 = vpop.f32.mrf.mxu0
  %v1384 = vadd.f32 0.0, %v1383
  %1385 = vmatmul.f32.gmra.mxu0 %v1322
  %v1386 = vpop.f32.mrf.mxu0
  %v1387 = vadd.f32 0.0, %v1386
  %1388 = vmatmul.f32.gmra.mxu0 %v1325
  %v1389 = vpop.f32.mrf.mxu0
  %v1390 = vadd.f32 0.0, %v1389
  %1391 = vmatmul.f32.gmra.mxu0 %v1328
  %v1392 = vpop.f32.mrf.mxu0
  %v1393 = vadd.f32 0.0, %v1392
  %1394 = vmatmul.f32.gmra.mxu0 %v1331
  %v1395 = vpop.f32.mrf.mxu0
  %v1396 = vadd.f32 0.0, %v1395
  %1397 = vmatmul.f32.gmra.mxu0 %v1334
  %v1398 = vpop.f32.mrf.mxu0
  %v1399 = vadd.f32 0.0, %v1398
  %1400 = vdwg.mxu0
  %v1401 = vmul.f32 %v623, %v1378
  %v1402 = vmul.f32 %v623, %v1381
  %v1403 = vmul.f32 %v623, %v1384
  %v1404 = vmul.f32 %v623, %v1387
  %v1405 = vmul.f32 %v623, %v1390
  %v1406 = vmul.f32 %v623, %v1393
  %v1407 = vmul.f32 %v623, %v1396
  %v1408 = vmul.f32 %v623, %v1399
  %v1409 = vadd.f32 %v1401, %v1038
  %v1410 = vadd.f32 %v1402, %v1039
  %v1411 = vadd.f32 %v1403, %v1040
  %v1412 = vadd.f32 %v1404, %v1041
  %v1413 = vadd.f32 %v1405, %v1042
  %v1414 = vadd.f32 %v1406, %v1043
  %v1415 = vadd.f32 %v1407, %v1044
  %v1416 = vadd.f32 %v1408, %v1045
  %s1417 = scalar_lea.vmem %s4, 128
  %1418 = vst.msk [vmem:[%s1417] sm:$0xff] %vm195, %v1409
  %1419 = vst.msk [vmem:[%s1417 + $0x8] sm:$0xff] %vm195, %v1410
  %1420 = vst.msk [vmem:[%s1417 + $0x10] sm:$0xff] %vm195, %v1411
  %1421 = vst.msk [vmem:[%s1417 + $0x18] sm:$0xff] %vm195, %v1412
  %1422 = vst.msk [vmem:[%s1417 + $0x20] sm:$0xff] %vm195, %v1413
  %1423 = vst.msk [vmem:[%s1417 + $0x28] sm:$0xff] %vm195, %v1414
  %1424 = vst.msk [vmem:[%s1417 + $0x30] sm:$0xff] %vm195, %v1415
  %1425 = vst.msk [vmem:[%s1417 + $0x38] sm:$0xff] %vm195, %v1416
  %s1426 = scalar_lea.vmem %s0, 192
  %v1427 = vld [vmem:[%s1426] sm:$0xff]
  %v1428 = vld [vmem:[%s1426 + $0x8] sm:$0xff]
  %v1429 = vld [vmem:[%s1426 + $0x10] sm:$0xff]
  %v1430 = vld [vmem:[%s1426 + $0x18] sm:$0xff]
  %v1431 = vld [vmem:[%s1426 + $0x20] sm:$0xff]
  %v1432 = vld [vmem:[%s1426 + $0x28] sm:$0xff]
  %v1433 = vld [vmem:[%s1426 + $0x30] sm:$0xff]
  %v1434 = vld [vmem:[%s1426 + $0x38] sm:$0xff]
  %1435 = vmatpush.msra.mxu0 0.0
  %1436 = vmatpush.msra.mxu0 0.0
  %1437 = vmatpush.msra.mxu0 0.0
  %1438 = vmatpush.msra.mxu0 0.0
  %1439 = vmatpush.msra.mxu0 0.0
  %1440 = vmatpush.msra.mxu0 0.0
  %1441 = vmatpush.msra.mxu0 0.0
  %1442 = vmatpush.msra.mxu0 0.0
  %1443 = vmatpush.msra.mxu0 %v1434
  %1444 = vmatpush.msra.mxu0 %v1433
  %1445 = vmatpush.msra.mxu0 %v1432
  %1446 = vmatpush.msra.mxu0 %v1431
  %1447 = vmatpush.msra.mxu0 %v1430
  %1448 = vmatpush.msra.mxu0 %v1429
  %1449 = vmatpush.msra.mxu0 %v1428
  %1450 = vmatpush.msra.mxu0 %v1427
  %1451 = vmatmul.f32.gmra.mxu0 %v197
  %v1452 = vpop.f32.mrf.mxu0
  %v1453 = vadd.f32 %v78, %v1452
  %1454 = vmatmul.f32.gmra.mxu0 %v200
  %v1455 = vpop.f32.mrf.mxu0
  %v1456 = vadd.f32 %v83, %v1455
  %1457 = vmatmul.f32.gmra.mxu0 %v203
  %v1458 = vpop.f32.mrf.mxu0
  %v1459 = vadd.f32 %v88, %v1458
  %1460 = vmatmul.f32.gmra.mxu0 %v206
  %v1461 = vpop.f32.mrf.mxu0
  %v1462 = vadd.f32 %v93, %v1461
  %1463 = vmatmul.f32.gmra.mxu0 %v209
  %v1464 = vpop.f32.mrf.mxu0
  %v1465 = vadd.f32 %v98, %v1464
  %1466 = vmatmul.f32.gmra.mxu0 %v212
  %v1467 = vpop.f32.mrf.mxu0
  %v1468 = vadd.f32 %v103, %v1467
  %1469 = vmatmul.f32.gmra.mxu0 %v215
  %v1470 = vpop.f32.mrf.mxu0
  %v1471 = vadd.f32 %v108, %v1470
  %1472 = vmatmul.f32.gmra.mxu0 %v218
  %v1473 = vpop.f32.mrf.mxu0
  %v1474 = vadd.f32 %v113, %v1473
  %1475 = vmatmul.f32.gmra.mxu0 %v221
  %v1476 = vpop.f32.mrf.mxu0
  %v1477 = vadd.f32 %v118, %v1476
  %1478 = vmatmul.f32.gmra.mxu0 %v224
  %v1479 = vpop.f32.mrf.mxu0
  %v1480 = vadd.f32 %v123, %v1479
  %1481 = vmatmul.f32.gmra.mxu0 %v227
  %v1482 = vpop.f32.mrf.mxu0
  %v1483 = vadd.f32 %v128, %v1482
  %1484 = vmatmul.f32.gmra.mxu0 %v230
  %v1485 = vpop.f32.mrf.mxu0
  %v1486 = vadd.f32 %v133, %v1485
  %1487 = vmatmul.f32.gmra.mxu0 %v233
  %v1488 = vpop.f32.mrf.mxu0
  %v1489 = vadd.f32 %v138, %v1488
  %1490 = vmatmul.f32.gmra.mxu0 %v236
  %v1491 = vpop.f32.mrf.mxu0
  %v1492 = vadd.f32 %v143, %v1491
  %1493 = vmatmul.f32.gmra.mxu0 %v239
  %v1494 = vpop.f32.mrf.mxu0
  %v1495 = vadd.f32 %v148, %v1494
  %1496 = vmatmul.f32.gmra.mxu0 %v242
  %v1497 = vpop.f32.mrf.mxu0
  %v1498 = vadd.f32 %v153, %v1497
  %1499 = vmatmul.f32.gmra.mxu0 %v245
  %v1500 = vpop.f32.mrf.mxu0
  %v1501 = vadd.f32 %v158, %v1500
  %1502 = vmatmul.f32.gmra.mxu0 %v248
  %v1503 = vpop.f32.mrf.mxu0
  %v1504 = vadd.f32 %v163, %v1503
  %1505 = vmatmul.f32.gmra.mxu0 %v251
  %v1506 = vpop.f32.mrf.mxu0
  %v1507 = vadd.f32 %v168, %v1506
  %1508 = vmatmul.f32.gmra.mxu0 %v254
  %v1509 = vpop.f32.mrf.mxu0
  %v1510 = vadd.f32 %v173, %v1509
  %1511 = vmatmul.f32.gmra.mxu0 %v257
  %v1512 = vpop.f32.mrf.mxu0
  %v1513 = vadd.f32 %v178, %v1512
  %1514 = vmatmul.f32.gmra.mxu0 %v260
  %v1515 = vpop.f32.mrf.mxu0
  %v1516 = vadd.f32 %v183, %v1515
  %1517 = vmatmul.f32.gmra.mxu0 %v263
  %v1518 = vpop.f32.mrf.mxu0
  %v1519 = vadd.f32 %v188, %v1518
  %1520 = vmatmul.f32.gmra.mxu0 %v266
  %v1521 = vpop.f32.mrf.mxu0
  %v1522 = vadd.f32 %v193, %v1521
  %1523 = vdwg.mxu0
  %v1525 = vsel %vm195, %v1453, 0
  %v1528 = vsel %vm195, %v1456, 0
  %v1531 = vsel %vm195, %v1459, 0
  %v1534 = vsel %vm195, %v1462, 0
  %v1537 = vsel %vm195, %v1465, 0
  %v1540 = vsel %vm195, %v1468, 0
  %v1543 = vsel %vm195, %v1471, 0
  %v1546 = vsel %vm195, %v1474, 0
  %v1549 = vsel %vm195, %v1477, 0
  %v1552 = vsel %vm195, %v1480, 0
  %v1555 = vsel %vm195, %v1483, 0
  %v1558 = vsel %vm195, %v1486, 0
  %v1561 = vsel %vm195, %v1489, 0
  %v1564 = vsel %vm195, %v1492, 0
  %v1567 = vsel %vm195, %v1495, 0
  %v1570 = vsel %vm195, %v1498, 0
  %1572 = vmatpush.xpose.msra.mxu0 0.0
  %1573 = vmatpush.xpose.msra.mxu0 0.0
  %1574 = vmatpush.xpose.msra.mxu0 0.0
  %1575 = vmatpush.xpose.msra.mxu0 0.0
  %1576 = vmatpush.xpose.msra.mxu0 0.0
  %1577 = vmatpush.xpose.msra.mxu0 0.0
  %1578 = vmatpush.xpose.msra.mxu0 0.0
  %1579 = vmatpush.xpose.msra.mxu0 0.0
  %1580 = vmatpush.xpose.msra.mxu0 %v1570
  %1581 = vmatpush.xpose.msra.mxu0 %v1567
  %1582 = vmatpush.xpose.msra.mxu0 %v1564
  %1583 = vmatpush.xpose.msra.mxu0 %v1561
  %1584 = vmatpush.xpose.msra.mxu0 %v1558
  %1585 = vmatpush.xpose.msra.mxu0 %v1555
  %1586 = vmatpush.xpose.msra.mxu0 %v1552
  %1587 = vmatpush.xpose.msra.mxu0 %v1549
  %1588 = vmatmul.f32.gmra.mxu0 %v1525
  %v1589 = vpop.f32.mrf.mxu0
  %v1590 = vadd.f32 0.0, %v1589
  %1591 = vmatmul.f32.gmra.mxu0 %v1528
  %v1592 = vpop.f32.mrf.mxu0
  %v1593 = vadd.f32 0.0, %v1592
  %1594 = vmatmul.f32.gmra.mxu0 %v1531
  %v1595 = vpop.f32.mrf.mxu0
  %v1596 = vadd.f32 0.0, %v1595
  %1597 = vmatmul.f32.gmra.mxu0 %v1534
  %v1598 = vpop.f32.mrf.mxu0
  %v1599 = vadd.f32 0.0, %v1598
  %1600 = vmatmul.f32.gmra.mxu0 %v1537
  %v1601 = vpop.f32.mrf.mxu0
  %v1602 = vadd.f32 0.0, %v1601
  %1603 = vmatmul.f32.gmra.mxu0 %v1540
  %v1604 = vpop.f32.mrf.mxu0
  %v1605 = vadd.f32 0.0, %v1604
  %1606 = vmatmul.f32.gmra.mxu0 %v1543
  %v1607 = vpop.f32.mrf.mxu0
  %v1608 = vadd.f32 0.0, %v1607
  %1609 = vmatmul.f32.gmra.mxu0 %v1546
  %v1610 = vpop.f32.mrf.mxu0
  %v1611 = vadd.f32 0.0, %v1610
  %1612 = vdwg.mxu0
  %v1613 = vsel %vm195, %v1590, -inf
  %1614 = vmax.xlane.f32.xlu0 %v1613
  %v1615 = vpop.xlane.xlu0 %1614
  %v1616 = vsel %vm195, %v1593, -inf
  %1617 = vmax.xlane.f32.xlu0 %v1616
  %v1618 = vpop.xlane.xlu0 %1617
  %v1619 = vsel %vm195, %v1596, -inf
  %1620 = vmax.xlane.f32.xlu0 %v1619
  %v1621 = vpop.xlane.xlu0 %1620
  %v1622 = vsel %vm195, %v1599, -inf
  %1623 = vmax.xlane.f32.xlu0 %v1622
  %v1624 = vpop.xlane.xlu0 %1623
  %v1625 = vsel %vm195, %v1602, -inf
  %1626 = vmax.xlane.f32.xlu0 %v1625
  %v1627 = vpop.xlane.xlu0 %1626
  %v1628 = vsel %vm195, %v1605, -inf
  %1629 = vmax.xlane.f32.xlu0 %v1628
  %v1630 = vpop.xlane.xlu0 %1629
  %v1631 = vsel %vm195, %v1608, -inf
  %1632 = vmax.xlane.f32.xlu0 %v1631
  %v1633 = vpop.xlane.xlu0 %1632
  %v1634 = vsel %vm195, %v1611, -inf
  %1635 = vmax.xlane.f32.xlu0 %v1634
  %v1636 = vpop.xlane.xlu0 %1635
  %v1637 = vsub.f32 %v1590, %v1615
  %v1638 = vsub.f32 %v1593, %v1618
  %v1639 = vsub.f32 %v1596, %v1621
  %v1640 = vsub.f32 %v1599, %v1624
  %v1641 = vsub.f32 %v1602, %v1627
  %v1642 = vsub.f32 %v1605, %v1630
  %v1643 = vsub.f32 %v1608, %v1633
  %v1644 = vsub.f32 %v1611, %v1636
  %v1645 = vmul.f32 %v1637, 1.442695
  %v1646 = vpow.pop %v1645
  %v1647 = vmul.f32 %v1638, 1.442695
  %v1648 = vpow.pop %v1647
  %v1649 = vmul.f32 %v1639, 1.442695
  %v1650 = vpow.pop %v1649
  %v1651 = vmul.f32 %v1640, 1.442695
  %v1652 = vpow.pop %v1651
  %v1653 = vmul.f32 %v1641, 1.442695
  %v1654 = vpow.pop %v1653
  %v1655 = vmul.f32 %v1642, 1.442695
  %v1656 = vpow.pop %v1655
  %v1657 = vmul.f32 %v1643, 1.442695
  %v1658 = vpow.pop %v1657
  %v1659 = vmul.f32 %v1644, 1.442695
  %v1660 = vpow.pop %v1659
  %v1661 = vsel %vm195, %v1646, 0.0
  %1662 = vadd.xlane.f32.xlu0 %v1661
  %v1663 = vpop.xlane.xlu0 %1662
  %v1664 = vsel %vm195, %v1648, 0.0
  %1665 = vadd.xlane.f32.xlu0 %v1664
  %v1666 = vpop.xlane.xlu0 %1665
  %v1667 = vsel %vm195, %v1650, 0.0
  %1668 = vadd.xlane.f32.xlu0 %v1667
  %v1669 = vpop.xlane.xlu0 %1668
  %v1670 = vsel %vm195, %v1652, 0.0
  %1671 = vadd.xlane.f32.xlu0 %v1670
  %v1672 = vpop.xlane.xlu0 %1671
  %v1673 = vsel %vm195, %v1654, 0.0
  %1674 = vadd.xlane.f32.xlu0 %v1673
  %v1675 = vpop.xlane.xlu0 %1674
  %v1676 = vsel %vm195, %v1656, 0.0
  %1677 = vadd.xlane.f32.xlu0 %v1676
  %v1678 = vpop.xlane.xlu0 %1677
  %v1679 = vsel %vm195, %v1658, 0.0
  %1680 = vadd.xlane.f32.xlu0 %v1679
  %v1681 = vpop.xlane.xlu0 %1680
  %v1682 = vsel %vm195, %v1660, 0.0
  %1683 = vadd.xlane.f32.xlu0 %v1682
  %v1684 = vpop.xlane.xlu0 %1683
  %v1685 = vrcp.pop %v1663
  %v1686 = vrcp.pop %v1666
  %v1687 = vrcp.pop %v1669
  %v1688 = vrcp.pop %v1672
  %v1689 = vrcp.pop %v1675
  %v1690 = vrcp.pop %v1678
  %v1691 = vrcp.pop %v1681
  %v1692 = vrcp.pop %v1684
  %v1693 = vmul.f32 %v1646, %v1685
  %v1694 = vmul.f32 %v1648, %v1686
  %v1695 = vmul.f32 %v1650, %v1687
  %v1696 = vmul.f32 %v1652, %v1688
  %v1697 = vmul.f32 %v1654, %v1689
  %v1698 = vmul.f32 %v1656, %v1690
  %v1699 = vmul.f32 %v1658, %v1691
  %v1700 = vmul.f32 %v1660, %v1692
  %v1702 = vsel %vm195, %v1501, 0
  %v1705 = vsel %vm195, %v1504, 0
  %v1708 = vsel %vm195, %v1507, 0
  %v1711 = vsel %vm195, %v1510, 0
  %v1714 = vsel %vm195, %v1513, 0
  %v1717 = vsel %vm195, %v1516, 0
  %v1720 = vsel %vm195, %v1519, 0
  %v1723 = vsel %vm195, %v1522, 0
  %v1726 = vsel %vm195, %v1693, 0
  %v1729 = vsel %vm195, %v1694, 0
  %v1732 = vsel %vm195, %v1695, 0
  %v1735 = vsel %vm195, %v1696, 0
  %v1738 = vsel %vm195, %v1697, 0
  %v1741 = vsel %vm195, %v1698, 0
  %v1744 = vsel %vm195, %v1699, 0
  %v1747 = vsel %vm195, %v1700, 0
  %1749 = vmatpush.xpose.msra.mxu0 0.0
  %1750 = vmatpush.xpose.msra.mxu0 0.0
  %1751 = vmatpush.xpose.msra.mxu0 0.0
  %1752 = vmatpush.xpose.msra.mxu0 0.0
  %1753 = vmatpush.xpose.msra.mxu0 0.0
  %1754 = vmatpush.xpose.msra.mxu0 0.0
  %1755 = vmatpush.xpose.msra.mxu0 0.0
  %1756 = vmatpush.xpose.msra.mxu0 0.0
  %1757 = vmatpush.xpose.msra.mxu0 %v1747
  %1758 = vmatpush.xpose.msra.mxu0 %v1744
  %1759 = vmatpush.xpose.msra.mxu0 %v1741
  %1760 = vmatpush.xpose.msra.mxu0 %v1738
  %1761 = vmatpush.xpose.msra.mxu0 %v1735
  %1762 = vmatpush.xpose.msra.mxu0 %v1732
  %1763 = vmatpush.xpose.msra.mxu0 %v1729
  %1764 = vmatpush.xpose.msra.mxu0 %v1726
  %1765 = vmatmul.f32.gmra.mxu0 %v1702
  %v1766 = vpop.f32.mrf.mxu0
  %v1767 = vadd.f32 0.0, %v1766
  %1768 = vmatmul.f32.gmra.mxu0 %v1705
  %v1769 = vpop.f32.mrf.mxu0
  %v1770 = vadd.f32 0.0, %v1769
  %1771 = vmatmul.f32.gmra.mxu0 %v1708
  %v1772 = vpop.f32.mrf.mxu0
  %v1773 = vadd.f32 0.0, %v1772
  %1774 = vmatmul.f32.gmra.mxu0 %v1711
  %v1775 = vpop.f32.mrf.mxu0
  %v1776 = vadd.f32 0.0, %v1775
  %1777 = vmatmul.f32.gmra.mxu0 %v1714
  %v1778 = vpop.f32.mrf.mxu0
  %v1779 = vadd.f32 0.0, %v1778
  %1780 = vmatmul.f32.gmra.mxu0 %v1717
  %v1781 = vpop.f32.mrf.mxu0
  %v1782 = vadd.f32 0.0, %v1781
  %1783 = vmatmul.f32.gmra.mxu0 %v1720
  %v1784 = vpop.f32.mrf.mxu0
  %v1785 = vadd.f32 0.0, %v1784
  %1786 = vmatmul.f32.gmra.mxu0 %v1723
  %v1787 = vpop.f32.mrf.mxu0
  %v1788 = vadd.f32 0.0, %v1787
  %1789 = vdwg.mxu0
  %v1790 = vmul.f32 %v623, %v1767
  %v1791 = vmul.f32 %v623, %v1770
  %v1792 = vmul.f32 %v623, %v1773
  %v1793 = vmul.f32 %v623, %v1776
  %v1794 = vmul.f32 %v623, %v1779
  %v1795 = vmul.f32 %v623, %v1782
  %v1796 = vmul.f32 %v623, %v1785
  %v1797 = vmul.f32 %v623, %v1788
  %v1798 = vadd.f32 %v1790, %v1427
  %v1799 = vadd.f32 %v1791, %v1428
  %v1800 = vadd.f32 %v1792, %v1429
  %v1801 = vadd.f32 %v1793, %v1430
  %v1802 = vadd.f32 %v1794, %v1431
  %v1803 = vadd.f32 %v1795, %v1432
  %v1804 = vadd.f32 %v1796, %v1433
  %v1805 = vadd.f32 %v1797, %v1434
  %s1806 = scalar_lea.vmem %s4, 192
  %1807 = vst.msk [vmem:[%s1806] sm:$0xff] %vm195, %v1798
  %1808 = vst.msk [vmem:[%s1806 + $0x8] sm:$0xff] %vm195, %v1799
  %1809 = vst.msk [vmem:[%s1806 + $0x10] sm:$0xff] %vm195, %v1800
  %1810 = vst.msk [vmem:[%s1806 + $0x18] sm:$0xff] %vm195, %v1801
  %1811 = vst.msk [vmem:[%s1806 + $0x20] sm:$0xff] %vm195, %v1802
  %1812 = vst.msk [vmem:[%s1806 + $0x28] sm:$0xff] %vm195, %v1803
  %1813 = vst.msk [vmem:[%s1806 + $0x30] sm:$0xff] %vm195, %v1804
  %1814 = vst.msk [vmem:[%s1806 + $0x38] sm:$0xff] %vm195, %v1805
  // Predicated region
  $region18: #{self_attention.1} parent=0 // pred_check
    _
  $region19: #{self_attention.1} parent=0 // pred_check_branch
    %1816 = sbr.rel (0) target = $region21
  $region20: #{self_attention.1} parent=0 // pred_region
    _
  $region21: #{self_attention.1} parent=0 // pred_fallthru
    _
  // Predicated region
  $region22: #{self_attention.1} parent=0 // pred_check
    _
  $region23: #{self_attention.1} parent=0 // pred_check_branch
    %1818 = sbr.rel (0) target = $region25
  $region24: #{self_attention.1} parent=0 // pred_region
    _
  $region25: #{self_attention.1} parent=0 // pred_fallthru
    _

</llo_original>
